<compile_context>
chip_gen: v7x
topology: tpu7x:2x2x1
jax: 0.10.0
libtpu: 0.0.40
codegen_flags: <defaults>
</compile_context>

<pallas_src>
import functools

import jax
import jax.numpy as jnp
from jax.experimental import pallas as pl
from jax.experimental.pallas import tpu as pltpu


def prompt_kernel(Bs, N,
                  smooth_ref,          # SMEM (1,) f32
                  x_ref, z_ref,        # VMEM (Bs*N, C) f32
                  w1_ref, b1_ref,      # VMEM (C, Hp) bf16, (1, Hp) f32
                  w2_ref, b2_ref,      # VMEM (C, Hp) bf16, (1, Hp) f32
                  w3_ref, b3_ref,      # VMEM (Hp, C) bf16, (1, C) f32
                  o_ref):              # VMEM (Bs*N, C) f32
    # bf16 operands into the MXU, f32 accumulation.
    x = x_ref[...].astype(jnp.bfloat16)            # (Bs*N, C)
    z = z_ref[...].astype(jnp.bfloat16)            # (Bs*N, C)

    # linear1(x), linear2(z): (Bs*N, Hp), f32
    h1 = jnp.dot(x, w1_ref[...], preferred_element_type=jnp.float32) + b1_ref[...]
    h2 = jnp.dot(z, w2_ref[...], preferred_element_type=jnp.float32) + b2_ref[...]

    smooth = smooth_ref[0]

    # softmax over the token axis N, per batch (== softmax(dim=-1) on the
    # permuted (B, H, N) view).  Static row slices keep everything 2-D.
    parts = []
    for b in range(Bs):
        hb = h1[b * N:(b + 1) * N, :]                              # (N, Hp)
        m = jnp.max(hb, axis=0, keepdims=True)                     # (1, Hp)
        e = jnp.exp(hb - m)
        inv = pl.reciprocal(jnp.sum(e, axis=0, keepdims=True), approx=True)
        parts.append(smooth * (e * inv) * hb)                      # (N, Hp)
    attn = parts[0] if Bs == 1 else jnp.concatenate(parts, axis=0)  # (Bs*N, Hp)

    # linear3(attn + h2): (Bs*N, C)
    out = (attn + h2).astype(jnp.bfloat16)
    o = jnp.dot(out, w3_ref[...], preferred_element_type=jnp.float32) + b3_ref[...]
    o_ref[...] = o.astype(o_ref.dtype)


def prepare_params(params, lane=128):
    """Pad hidden dim to a lane-dense multiple of 128 and cast weights to bf16.

    Padding is mathematically exact (zero weights / zero bias / zero w3 rows
    contribute nothing).  Done once, outside the kernel."""
    H = params["w1"].shape[1]
    Hp = ((H + lane - 1) // lane) * lane
    pad = Hp - H
    return {
        "w1": jnp.pad(params["w1"], ((0, 0), (0, pad))).astype(jnp.bfloat16),
        "b1": jnp.pad(params["b1"], ((0, 0), (0, pad))),                 # f32
        "w2": jnp.pad(params["w2"], ((0, 0), (0, pad))).astype(jnp.bfloat16),
        "b2": jnp.pad(params["b2"], ((0, 0), (0, pad))),                 # f32
        "w3": jnp.pad(params["w3"], ((0, pad), (0, 0))).astype(jnp.bfloat16),
        "b3": params["b3"],                                              # f32
        "smooth": params["smooth"],                                      # f32
    }


def prompt_forward(x, z, prepped, *, batch_blocks=1):
    """x, z: (B, N, C) float32. `prepped` from prepare_params(). Returns (B, N, C).

    batch_blocks=1 -> single grid step (best on v5e/v6e, one TensorCore).
    batch_blocks=2 -> two "parallel" steps, one per TensorCore on v7x.
    """
    B, N, C = x.shape
    Hp = prepped["w1"].shape[1]
    assert B % batch_blocks == 0
    Bs = B // batch_blocks          # batches per grid step
    BN = Bs * N                     # rows per grid step (multiple of 8 for N>=8)

    x2 = x.reshape(B * N, C)
    z2 = z.reshape(B * N, C)

    kernel = functools.partial(prompt_kernel, Bs, N)

    grid_spec = pltpu.PrefetchScalarGridSpec(
        num_scalar_prefetch=0,
        grid=(batch_blocks,),
        in_specs=[
            pl.BlockSpec(memory_space=pltpu.MemorySpace.SMEM),        # smooth
            pl.BlockSpec((BN, C), lambda i: (i, 0)),                  # x (flat)
            pl.BlockSpec((BN, C), lambda i: (i, 0)),                  # z (flat)
            pl.BlockSpec((C, Hp), lambda i: (0, 0)),                  # w1 (bf16)
            pl.BlockSpec((1, Hp), lambda i: (0, 0)),                  # b1
            pl.BlockSpec((C, Hp), lambda i: (0, 0)),                  # w2 (bf16)
            pl.BlockSpec((1, Hp), lambda i: (0, 0)),                  # b2
            pl.BlockSpec((Hp, C), lambda i: (0, 0)),                  # w3 (bf16)
            pl.BlockSpec((1, C), lambda i: (0, 0)),                   # b3
        ],
        out_specs=pl.BlockSpec((BN, C), lambda i: (i, 0)),
    )

    out2 = pl.pallas_call(
        kernel,
        out_shape=jax.ShapeDtypeStruct((B * N, C), x.dtype),
        grid_spec=grid_spec,
        compiler_params=pltpu.CompilerParams(
            dimension_semantics=("parallel",)),
    )(prepped["smooth"], x2, z2,
      prepped["w1"], prepped["b1"],
      prepped["w2"], prepped["b2"],
      prepped["w3"], prepped["b3"])

    return out2.reshape(B, N, C)


def prompt_reference(x, z, params):
    """Pure-JAX reference mirroring the PyTorch forward (f32 math)."""
    h1 = jnp.einsum("bnc,ch->bnh", x, params["w1"]) + params["b1"][0]
    xt = jnp.transpose(h1, (0, 2, 1))                       # (B, H, N)
    sm = jax.nn.softmax(xt, axis=-1)
    out = params["smooth"][0] * sm * xt
    out = jnp.transpose(out, (0, 2, 1))                     # (B, N, H)
    out = out + jnp.einsum("bnc,ch->bnh", z, params["w2"]) + params["b2"][0]
    out = jnp.einsum("bnh,hc->bnc", out, params["w3"]) + params["b3"][0]
    return out


def init_params(key, in_dim=768, hid_dim=768 // 16, std=0.02):
    """Deterministic init matching the module's __init__ shapes.
    Linear weights ~ trunc_normal(std=0.02), biases = 0, smooth = 10.0."""
    k1, k2, k3 = jax.random.split(key, 3)

    def tn(k, shape):
        return std * jax.random.truncated_normal(k, -2.0, 2.0, shape, jnp.float32)

    # Stored as (in_features, out_features) so the kernel does x @ W directly.
    return {
        "w1": tn(k1, (in_dim, hid_dim)),
        "b1": jnp.zeros((1, hid_dim), jnp.float32),
        "w2": tn(k2, (in_dim, hid_dim)),
        "b2": jnp.zeros((1, hid_dim), jnp.float32),
        "w3": tn(k3, (hid_dim, in_dim)),
        "b3": jnp.zeros((1, in_dim), jnp.float32),
        "smooth": jnp.full((1,), 10.0, jnp.float32),
    }


if __name__ == "__main__":
    B, N, C = 2, 16, 768           # in_dim=768 is hard-coded in the module
    H = C // 16                    # 48
    key = jax.random.PRNGKey(0)
    kp, kx, kz = jax.random.split(key, 3)

    params = init_params(kp, in_dim=C, hid_dim=H)
    x = jax.random.normal(kx, (B, N, C), jnp.float32)
    z = jax.random.normal(kz, (B, N, C), jnp.float32)

    prepped = prepare_params(params)
    out = prompt_forward(x, z, prepped, batch_blocks=1)
    out = jax.block_until_ready(out)

    # Reference uses the same bf16-quantized weights (upcast to f32, padding
    # stripped -- the zero padding is exact), so the check isolates kernel
    # correctness; residual error is from bf16 MXU operands / approx recip.
    dq = {
        "w1": prepped["w1"].astype(jnp.float32)[:, :H],
        "b1": params["b1"],
        "w2": prepped["w2"].astype(jnp.float32)[:, :H],
        "b2": params["b2"],
        "w3": prepped["w3"].astype(jnp.float32)[:H, :],
        "b3": params["b3"],
        "smooth": params["smooth"],
    }
    ref = prompt_reference(x, z, dq)

    assert out.shape == (B, N, C)
    assert jnp.allclose(out, ref, atol=5e-3, rtol=5e-3), \
        f"max abs err {jnp.max(jnp.abs(out - ref))}"

    print("KERNEL_OK")
</pallas_src>

<mosaic_0001>
module attributes {stable_mosaic.version = 11 : i64} {
  func.func @prompt_kernel(%arg0: i32, %arg1: memref<1xf32, #tpu.memory_space<smem>>, %arg2: memref<32x768xf32, #tpu.memory_space<vmem>>, %arg3: memref<32x768xf32, #tpu.memory_space<vmem>>, %arg4: memref<768x128xbf16, #tpu.memory_space<vmem>>, %arg5: memref<1x128xf32, #tpu.memory_space<vmem>>, %arg6: memref<768x128xbf16, #tpu.memory_space<vmem>>, %arg7: memref<1x128xf32, #tpu.memory_space<vmem>>, %arg8: memref<128x768xbf16, #tpu.memory_space<vmem>>, %arg9: memref<1x768xf32, #tpu.memory_space<vmem>>, %arg10: memref<32x768xf32, #tpu.memory_space<vmem>>) attributes {dimension_semantics = [#tpu.dimension_semantics<parallel>], iteration_bounds = array<i64: 1>, scalar_prefetch = 0 : i64, scratch_operands = 0 : i64, tpu.core_type = #tpu.core_type<tc>, window_params = [{transform_indices = @transform_0, window_bounds = array<i64: 1>}, {transform_indices = @transform_1, window_bounds = array<i64: 32, 768>}, {transform_indices = @transform_2, window_bounds = array<i64: 32, 768>}, {pipeline_mode = #tpu.pipeline_mode<synchronous>, transform_indices = @transform_3, window_bounds = array<i64: 768, 128>}, {pipeline_mode = #tpu.pipeline_mode<synchronous>, transform_indices = @transform_4, window_bounds = array<i64: 1, 128>}, {pipeline_mode = #tpu.pipeline_mode<synchronous>, transform_indices = @transform_5, window_bounds = array<i64: 768, 128>}, {pipeline_mode = #tpu.pipeline_mode<synchronous>, transform_indices = @transform_6, window_bounds = array<i64: 1, 128>}, {pipeline_mode = #tpu.pipeline_mode<synchronous>, transform_indices = @transform_7, window_bounds = array<i64: 128, 768>}, {pipeline_mode = #tpu.pipeline_mode<synchronous>, transform_indices = @transform_8, window_bounds = array<i64: 1, 768>}, {transform_indices = @transform_9, window_bounds = array<i64: 32, 768>}]} {
    %c0 = arith.constant 0 : index
    %c0_0 = arith.constant 0 : index
    %0 = vector.load %arg2[%c0, %c0_0] : memref<32x768xf32, #tpu.memory_space<vmem>>, vector<32x768xf32>
    %1 = arith.truncf %0 : vector<32x768xf32> to vector<32x768xbf16>
    %c0_1 = arith.constant 0 : index
    %c0_2 = arith.constant 0 : index
    %2 = vector.load %arg3[%c0_1, %c0_2] : memref<32x768xf32, #tpu.memory_space<vmem>>, vector<32x768xf32>
    %3 = arith.truncf %2 : vector<32x768xf32> to vector<32x768xbf16>
    %c0_3 = arith.constant 0 : index
    %c0_4 = arith.constant 0 : index
    %4 = vector.load %arg4[%c0_3, %c0_4] : memref<768x128xbf16, #tpu.memory_space<vmem>>, vector<768x128xbf16>
    %cst = arith.constant dense<0.000000e+00> : vector<32x128xf32>
    %5 = tpu.matmul %1, %4, %cst {dimension_numbers = #tpu.dot_dimension_numbers<[1], [0], [0], [1], [0, 0, 1, 1], [], []>} : vector<32x768xbf16>, vector<768x128xbf16>, vector<32x128xf32> -> vector<32x128xf32>
    %c0_5 = arith.constant 0 : index
    %c0_6 = arith.constant 0 : index
    %6 = vector.load %arg5[%c0_5, %c0_6] : memref<1x128xf32, #tpu.memory_space<vmem>>, vector<1x128xf32>
    %7 = vector.broadcast %6 : vector<1x128xf32> to vector<32x128xf32>
    %8 = arith.addf %5, %7 : vector<32x128xf32>
    %c0_7 = arith.constant 0 : index
    %c0_8 = arith.constant 0 : index
    %9 = vector.load %arg6[%c0_7, %c0_8] : memref<768x128xbf16, #tpu.memory_space<vmem>>, vector<768x128xbf16>
    %cst_9 = arith.constant dense<0.000000e+00> : vector<32x128xf32>
    %10 = tpu.matmul %3, %9, %cst_9 {dimension_numbers = #tpu.dot_dimension_numbers<[1], [0], [0], [1], [0, 0, 1, 1], [], []>} : vector<32x768xbf16>, vector<768x128xbf16>, vector<32x128xf32> -> vector<32x128xf32>
    %c0_10 = arith.constant 0 : index
    %c0_11 = arith.constant 0 : index
    %11 = vector.load %arg7[%c0_10, %c0_11] : memref<1x128xf32, #tpu.memory_space<vmem>>, vector<1x128xf32>
    %12 = vector.broadcast %11 : vector<1x128xf32> to vector<32x128xf32>
    %13 = arith.addf %10, %12 : vector<32x128xf32>
    %c0_12 = arith.constant 0 : index
    %14 = memref.load %arg1[%c0_12] : memref<1xf32, #tpu.memory_space<smem>>
    %15 = vector.extract_strided_slice %8 {offsets = [0, 0], sizes = [16, 128], strides = [1, 1]} : vector<32x128xf32> to vector<16x128xf32>
    %cst_13 = arith.constant dense<0xFF800000> : vector<128xf32>
    %16 = vector.multi_reduction <maximumf>, %15, %cst_13 [0] : vector<16x128xf32> to vector<128xf32>
    %17 = vector.shape_cast %16 : vector<128xf32> to vector<1x128xf32>
    %18 = vector.broadcast %17 : vector<1x128xf32> to vector<16x128xf32>
    %19 = arith.subf %15, %18 : vector<16x128xf32>
    %20 = math.exp %19 : vector<16x128xf32>
    %cst_14 = arith.constant dense<0.000000e+00> : vector<128xf32>
    %21 = vector.multi_reduction <add>, %20, %cst_14 [0] : vector<16x128xf32> to vector<128xf32>
    %22 = vector.shape_cast %21 : vector<128xf32> to vector<1x128xf32>
    %23 = tpu.reciprocal %22 {approx = true} : vector<1x128xf32> -> vector<1x128xf32>
    %24 = vector.broadcast %23 : vector<1x128xf32> to vector<16x128xf32>
    %25 = arith.mulf %20, %24 : vector<16x128xf32>
    %26 = vector.broadcast %14 : f32 to vector<16x128xf32>
    %27 = arith.mulf %26, %25 : vector<16x128xf32>
    %28 = arith.mulf %27, %15 : vector<16x128xf32>
    %29 = vector.extract_strided_slice %8 {offsets = [16, 0], sizes = [16, 128], strides = [1, 1]} : vector<32x128xf32> to vector<16x128xf32>
    %cst_15 = arith.constant dense<0xFF800000> : vector<128xf32>
    %30 = vector.multi_reduction <maximumf>, %29, %cst_15 [0] : vector<16x128xf32> to vector<128xf32>
    %31 = vector.shape_cast %30 : vector<128xf32> to vector<1x128xf32>
    %32 = vector.broadcast %31 : vector<1x128xf32> to vector<16x128xf32>
    %33 = arith.subf %29, %32 : vector<16x128xf32>
    %34 = math.exp %33 : vector<16x128xf32>
    %cst_16 = arith.constant dense<0.000000e+00> : vector<128xf32>
    %35 = vector.multi_reduction <add>, %34, %cst_16 [0] : vector<16x128xf32> to vector<128xf32>
    %36 = vector.shape_cast %35 : vector<128xf32> to vector<1x128xf32>
    %37 = tpu.reciprocal %36 {approx = true} : vector<1x128xf32> -> vector<1x128xf32>
    %38 = vector.broadcast %37 : vector<1x128xf32> to vector<16x128xf32>
    %39 = arith.mulf %34, %38 : vector<16x128xf32>
    %40 = vector.broadcast %14 : f32 to vector<16x128xf32>
    %41 = arith.mulf %40, %39 : vector<16x128xf32>
    %42 = arith.mulf %41, %29 : vector<16x128xf32>
    %43 = tpu.concatenate %28, %42 in 0 : vector<16x128xf32>, vector<16x128xf32> -> vector<32x128xf32>
    %44 = arith.addf %43, %13 : vector<32x128xf32>
    %45 = arith.truncf %44 : vector<32x128xf32> to vector<32x128xbf16>
    %c0_17 = arith.constant 0 : index
    %c0_18 = arith.constant 0 : index
    %46 = vector.load %arg8[%c0_17, %c0_18] : memref<128x768xbf16, #tpu.memory_space<vmem>>, vector<128x768xbf16>
    %cst_19 = arith.constant dense<0.000000e+00> : vector<32x768xf32>
    %47 = tpu.matmul %45, %46, %cst_19 {dimension_numbers = #tpu.dot_dimension_numbers<[1], [0], [0], [1], [0, 0, 1, 1], [], []>} : vector<32x128xbf16>, vector<128x768xbf16>, vector<32x768xf32> -> vector<32x768xf32>
    %c0_20 = arith.constant 0 : index
    %c0_21 = arith.constant 0 : index
    %48 = vector.load %arg9[%c0_20, %c0_21] : memref<1x768xf32, #tpu.memory_space<vmem>>, vector<1x768xf32>
    %49 = vector.broadcast %48 : vector<1x768xf32> to vector<32x768xf32>
    %50 = arith.addf %47, %49 : vector<32x768xf32>
    %c0_22 = arith.constant 0 : index
    %c0_23 = arith.constant 0 : index
    %51 = vector.load %arg10[%c0_22, %c0_23] : memref<32x768xf32, #tpu.memory_space<vmem>>, vector<32x768xf32>
    tpu.vector_store %arg10[%c0_22, %c0_23], %50 {strides = array<i32>} : memref<32x768xf32, #tpu.memory_space<vmem>>, vector<32x768xf32>,
    return
  }
  func.func @transform_0(%arg0: i32) -> i32 {
    %c0_i32 = arith.constant 0 : i32
    %c0_i32_0 = arith.constant 0 : i32
    return %c0_i32 : i32
  }
  func.func @transform_1(%arg0: i32) -> (i32, i32) {
    %c0_i32 = arith.constant 0 : i32
    %c0_i32_0 = arith.constant 0 : i32
    return %arg0, %c0_i32 : i32, i32
  }
  func.func @transform_2(%arg0: i32) -> (i32, i32) {
    %c0_i32 = arith.constant 0 : i32
    %c0_i32_0 = arith.constant 0 : i32
    return %arg0, %c0_i32 : i32, i32
  }
  func.func @transform_3(%arg0: i32) -> (i32, i32) {
    %c0_i32 = arith.constant 0 : i32
    %c0_i32_0 = arith.constant 0 : i32
    %c0_i32_1 = arith.constant 0 : i32
    return %c0_i32, %c0_i32_0 : i32, i32
  }
  func.func @transform_4(%arg0: i32) -> (i32, i32) {
    %c0_i32 = arith.constant 0 : i32
    %c0_i32_0 = arith.constant 0 : i32
    %c0_i32_1 = arith.constant 0 : i32
    return %c0_i32, %c0_i32_0 : i32, i32
  }
  func.func @transform_5(%arg0: i32) -> (i32, i32) {
    %c0_i32 = arith.constant 0 : i32
    %c0_i32_0 = arith.constant 0 : i32
    %c0_i32_1 = arith.constant 0 : i32
    return %c0_i32, %c0_i32_0 : i32, i32
  }
  func.func @transform_6(%arg0: i32) -> (i32, i32) {
    %c0_i32 = arith.constant 0 : i32
    %c0_i32_0 = arith.constant 0 : i32
    %c0_i32_1 = arith.constant 0 : i32
    return %c0_i32, %c0_i32_0 : i32, i32
  }
  func.func @transform_7(%arg0: i32) -> (i32, i32) {
    %c0_i32 = arith.constant 0 : i32
    %c0_i32_0 = arith.constant 0 : i32
    %c0_i32_1 = arith.constant 0 : i32
    return %c0_i32, %c0_i32_0 : i32, i32
  }
  func.func @transform_8(%arg0: i32) -> (i32, i32) {
    %c0_i32 = arith.constant 0 : i32
    %c0_i32_0 = arith.constant 0 : i32
    %c0_i32_1 = arith.constant 0 : i32
    return %c0_i32, %c0_i32_0 : i32, i32
  }
  func.func @transform_9(%arg0: i32) -> (i32, i32) {
    %c0_i32 = arith.constant 0 : i32
    %c0_i32_0 = arith.constant 0 : i32
    return %arg0, %c0_i32 : i32, i32
  }
}

</mosaic_0001>

<llo_original>
// kernel: tpu_custom_call.1
$region0: #{tpu_custom_call.1}
  #allocation0 [shape = 'u32[]', space=smem, size = 0x4, offset = 0x4, fixed_abs, tag = 'smem constant byte address 0x4 - core index']
  #allocation1 [shape = 'u32[144,128]{1,0:T(1,128)}', space=vmem, size = 0x12000, scoped, tag = 'internal scratch']
  #allocation2 [shape = 'f32[1]{0:T(128)S(6)}', space=smem, size = 0x200, scoped, tag = 'scoped memory for tpu_custom_call.1']
  %s0 = inlined_call_operand.<no memory space> [shape: f32[1], index: 0, kind: input, shape index: {}]
  %s1 = inlined_call_operand.hbm [shape: f32[32,768], index: 1, kind: input, shape index: {}]
  %s2 = inlined_call_operand.hbm [shape: f32[32,768], index: 2, kind: input, shape index: {}]
  %s3 = inlined_call_operand.hbm [shape: bf16[768,128], index: 3, kind: input, shape index: {}]
  %s4 = inlined_call_operand.vmem [shape: f32[1,128], index: 4, kind: input, shape index: {}]
  %s5 = inlined_call_operand.hbm [shape: bf16[768,128], index: 5, kind: input, shape index: {}]
  %s6 = inlined_call_operand.vmem [shape: f32[1,128], index: 6, kind: input, shape index: {}]
  %s7 = inlined_call_operand.hbm [shape: bf16[128,768], index: 7, kind: input, shape index: {}]
  %s8 = inlined_call_operand.vmem [shape: f32[1,768], index: 8, kind: input, shape index: {}]
  %s9 = inlined_call_operand.hbm [shape: f32[32,768], index: 9, kind: output, shape index: {}]
  %s10 = sld [smem:[#allocation0]]
  $region66: #{tpu_custom_call.1} parent=0
    _
  %s12 = ssub.s32 1, %s10
  %s13 = scalar_select 0, %s12, %s10
  %14 = sst [smem:[#allocation2]] %s0
  $region1: #{tpu_custom_call.1} parent=0
    #allocation3 [shape = 'u8[98304]{0}', space=vmem, size = 0x18000, scoped, tag = 'input window, operand 1, single buffered']
    #allocation4 [shape = 's32[1]{0}', space=sflag, size = 0x4, scoped, tag = 'scoped memory for tpu_custom_call.1']
    #allocation5 [shape = 's32[1]{0}', space=sflag, size = 0x4, scoped, tag = 'scoped memory for tpu_custom_call.1']
    #allocation6 [shape = 'u8[98304]{0}', space=vmem, size = 0x18000, scoped, tag = 'input window, operand 2, single buffered']
    #allocation7 [shape = 's32[1]{0}', space=sflag, size = 0x4, scoped, tag = 'scoped memory for tpu_custom_call.1']
    #allocation8 [shape = 'u8[196608]{0}', space=vmem, size = 0x30000, scoped, tag = 'input window, operand 3, single buffered']
    #allocation9 [shape = 'u8[196608]{0}', space=vmem, size = 0x30000, scoped, tag = 'input window, operand 5, single buffered']
    #allocation10 [shape = 's32[1]{0}', space=sflag, size = 0x4, scoped, tag = 'scoped memory for tpu_custom_call.1']
    #allocation11 [shape = 'u8[196608]{0}', space=vmem, size = 0x30000, scoped, tag = 'input window, operand 7, single buffered']
    #allocation12 [shape = 'u8[98304]{0}', space=vmem, size = 0x18000, scoped, tag = 'output window, operand 0, single buffered']
    %15 = vsyncpa [#allocation4], 0
    %16 = vsyncpa [#allocation7], 0
    %17 = vsyncpa [#allocation10], 0
    %18 = vsyncpa [#allocation5], 0
    // Predicated region
    $region2: #{tpu_custom_call.1} parent=1 // pred_check
      _
    $region3: #{tpu_custom_call.1} parent=1 // pred_check_branch
      %20 = sbr.rel (0) target = $region5
    $region4: #{tpu_custom_call.1} parent=1 // pred_region
      _
    $region5: #{tpu_custom_call.1} parent=1 // pred_fallthru
      _
    // Predicated region
    $region6: #{tpu_custom_call.1} parent=1 // pred_check
      _
    $region7: #{tpu_custom_call.1} parent=1 // pred_check_branch
      %22 = sbr.rel (0) target = $region9
    $region8: #{tpu_custom_call.1} parent=1 // pred_region
      %s24 = ssub.s32 3072, 3072
      %25 = vsyncadd [#allocation4], %s24
      %s26 = sshll.u32 [#allocation3], 4
      %s27 = int_to_ptr.vmem [resolvable:$true] %s26
      %32 = dma.hbm_to_vmem [thread:$0]  %s1, 3072, %s27, [#allocation4], 768, 768, 48
    $region9: #{tpu_custom_call.1} parent=1 // pred_fallthru
      _
    // Predicated region
    $region10: #{tpu_custom_call.1} parent=1 // pred_check
      _
    $region11: #{tpu_custom_call.1} parent=1 // pred_check_branch
      %34 = sbr.rel (0) target = $region13
    $region12: #{tpu_custom_call.1} parent=1 // pred_region
      %s36 = ssub.s32 3072, 3072
      %37 = vsyncadd [#allocation7], %s36
      %s38 = sshll.u32 [#allocation6], 4
      %s39 = int_to_ptr.vmem [resolvable:$true] %s38
      %44 = dma.hbm_to_vmem [thread:$0]  %s2, 3072, %s39, [#allocation7], 768, 768, 48
    $region13: #{tpu_custom_call.1} parent=1 // pred_fallthru
      _
    // Predicated region
    $region14: #{tpu_custom_call.1} parent=1 // pred_check
      _
    $region15: #{tpu_custom_call.1} parent=1 // pred_check_branch
      %46 = sbr.rel (0) target = $region17
    $region16: #{tpu_custom_call.1} parent=1 // pred_region
      %s48 = ssub.s32 6144, 6144
      %49 = vsyncadd [#allocation7], %s48
      %s50 = sshll.u32 [#allocation8], 4
      %s51 = int_to_ptr.vmem [resolvable:$true] %s50
      %56 = dma.hbm_to_vmem [thread:$0]  %s3, 6144, %s51, [#allocation7], 64, 64, 4
    $region17: #{tpu_custom_call.1} parent=1 // pred_fallthru
      _
    // Predicated region
    $region18: #{tpu_custom_call.1} parent=1 // pred_check
      _
    $region19: #{tpu_custom_call.1} parent=1 // pred_check_branch
      %58 = sbr.rel (0) target = $region21
    $region20: #{tpu_custom_call.1} parent=1 // pred_region
      _
    $region21: #{tpu_custom_call.1} parent=1 // pred_fallthru
      _
    // Predicated region
    $region22: #{tpu_custom_call.1} parent=1 // pred_check
      _
    $region23: #{tpu_custom_call.1} parent=1 // pred_check_branch
      %60 = sbr.rel (0) target = $region25
    $region24: #{tpu_custom_call.1} parent=1 // pred_region
      %s62 = ssub.s32 6144, 6144
      %63 = vsyncadd [#allocation10], %s62
      %s64 = sshll.u32 [#allocation9], 4
      %s65 = int_to_ptr.vmem [resolvable:$true] %s64
      %70 = dma.hbm_to_vmem [thread:$0]  %s5, 6144, %s65, [#allocation10], 64, 64, 4
    $region25: #{tpu_custom_call.1} parent=1 // pred_fallthru
      _
    // Predicated region
    $region26: #{tpu_custom_call.1} parent=1 // pred_check
      _
    $region27: #{tpu_custom_call.1} parent=1 // pred_check_branch
      %72 = sbr.rel (0) target = $region29
    $region28: #{tpu_custom_call.1} parent=1 // pred_region
      _
    $region29: #{tpu_custom_call.1} parent=1 // pred_fallthru
      _
    // Predicated region
    $region30: #{tpu_custom_call.1} parent=1 // pred_check
      _
    $region31: #{tpu_custom_call.1} parent=1 // pred_check_branch
      %74 = sbr.rel (0) target = $region33
    $region32: #{tpu_custom_call.1} parent=1 // pred_region
      %s76 = ssub.s32 6144, 6144
      %77 = vsyncadd [#allocation10], %s76
      %s78 = sshll.u32 [#allocation11], 4
      %s79 = int_to_ptr.vmem [resolvable:$true] %s78
      %84 = dma.hbm_to_vmem [thread:$0]  %s7, 6144, %s79, [#allocation10], 384, 384, 24
    $region33: #{tpu_custom_call.1} parent=1 // pred_fallthru
      _
    // Predicated region
    $region34: #{tpu_custom_call.1} parent=1 // pred_check
      _
    $region35: #{tpu_custom_call.1} parent=1 // pred_check_branch
      %86 = sbr.rel (0) target = $region37
    $region36: #{tpu_custom_call.1} parent=1 // pred_region
      _
    $region37: #{tpu_custom_call.1} parent=1 // pred_fallthru
      _
    // Predicated region
    $region38: #{tpu_custom_call.1} parent=1 // pred_check
      _
    $region39: #{tpu_custom_call.1} parent=1 // pred_check_branch
      %88 = sbr.rel (0) target = $region41
    $region40: #{tpu_custom_call.1} parent=1 // pred_region
      %89 = dma.done [#allocation4], 3072
    $region41: #{tpu_custom_call.1} parent=1 // pred_fallthru
      _
    // Predicated region
    $region42: #{tpu_custom_call.1} parent=1 // pred_check
      _
    $region43: #{tpu_custom_call.1} parent=1 // pred_check_branch
      %91 = sbr.rel (0) target = $region45
    $region44: #{tpu_custom_call.1} parent=1 // pred_region
      %92 = dma.done [#allocation7], 3072
    $region45: #{tpu_custom_call.1} parent=1 // pred_fallthru
      _
    // Predicated region
    $region46: #{tpu_custom_call.1} parent=1 // pred_check
      _
    $region47: #{tpu_custom_call.1} parent=1 // pred_check_branch
      %94 = sbr.rel (0) target = $region49
    $region48: #{tpu_custom_call.1} parent=1 // pred_region
      %95 = dma.done [#allocation7], 6144
    $region49: #{tpu_custom_call.1} parent=1 // pred_fallthru
      _
    // Predicated region
    $region50: #{tpu_custom_call.1} parent=1 // pred_check
      _
    $region51: #{tpu_custom_call.1} parent=1 // pred_check_branch
      %97 = sbr.rel (0) target = $region53
    $region52: #{tpu_custom_call.1} parent=1 // pred_region
      %98 = dma.done [#allocation10], 6144
    $region53: #{tpu_custom_call.1} parent=1 // pred_fallthru
      _
    // Predicated region
    $region54: #{tpu_custom_call.1} parent=1 // pred_check
      _
    $region55: #{tpu_custom_call.1} parent=1 // pred_check_branch
      %100 = sbr.rel (0) target = $region57
    $region56: #{tpu_custom_call.1} parent=1 // pred_region
      %101 = dma.done [#allocation10], 6144
    $region57: #{tpu_custom_call.1} parent=1 // pred_fallthru
      _
    %v103 = vld [vmem:[#allocation3] sm:$0xff]
    %v104 = vld [vmem:[#allocation3 + $0x8] sm:$0xff]
    %v105 = vld [vmem:[#allocation3 + $0x10] sm:$0xff]
    %v106 = vld [vmem:[#allocation3 + $0x18] sm:$0xff]
    %v107 = vld [vmem:[#allocation3 + $0x20] sm:$0xff]
    %v108 = vld [vmem:[#allocation3 + $0x28] sm:$0xff]
    %v109 = vld [vmem:[#allocation3 + $0x30] sm:$0xff]
    %v110 = vld [vmem:[#allocation3 + $0x38] sm:$0xff]
    %v111 = vld [vmem:[#allocation3 + $0x40] sm:$0xff]
    %v112 = vld [vmem:[#allocation3 + $0x48] sm:$0xff]
    %v113 = vld [vmem:[#allocation3 + $0x50] sm:$0xff]
    %v114 = vld [vmem:[#allocation3 + $0x58] sm:$0xff]
    %v115 = vld [vmem:[#allocation3 + $0x60] sm:$0xff]
    %v116 = vld [vmem:[#allocation3 + $0x68] sm:$0xff]
    %v117 = vld [vmem:[#allocation3 + $0x70] sm:$0xff]
    %v118 = vld [vmem:[#allocation3 + $0x78] sm:$0xff]
    %v119 = vld [vmem:[#allocation3 + $0x80] sm:$0xff]
    %v120 = vld [vmem:[#allocation3 + $0x88] sm:$0xff]
    %v121 = vld [vmem:[#allocation3 + $0x90] sm:$0xff]
    %v122 = vld [vmem:[#allocation3 + $0x98] sm:$0xff]
    %v123 = vld [vmem:[#allocation3 + $0xa0] sm:$0xff]
    %v124 = vld [vmem:[#allocation3 + $0xa8] sm:$0xff]
    %v125 = vld [vmem:[#allocation3 + $0xb0] sm:$0xff]
    %v126 = vld [vmem:[#allocation3 + $0xb8] sm:$0xff]
    %v127 = vpack.c.bf16 %v109, %v103
    %v128 = vpack.c.bf16 %v110, %v104
    %v129 = vpack.c.bf16 %v111, %v105
    %v130 = vpack.c.bf16 %v112, %v106
    %v131 = vpack.c.bf16 %v113, %v107
    %v132 = vpack.c.bf16 %v114, %v108
    %v133 = vpack.c.bf16 %v121, %v115
    %v134 = vpack.c.bf16 %v122, %v116
    %v135 = vpack.c.bf16 %v123, %v117
    %v136 = vpack.c.bf16 %v124, %v118
    %v137 = vpack.c.bf16 %v125, %v119
    %v138 = vpack.c.bf16 %v126, %v120
    %v139 = vld [vmem:[#allocation6] sm:$0xff]
    %v140 = vld [vmem:[#allocation6 + $0x8] sm:$0xff]
    %v141 = vld [vmem:[#allocation6 + $0x10] sm:$0xff]
    %v142 = vld [vmem:[#allocation6 + $0x18] sm:$0xff]
    %v143 = vld [vmem:[#allocation6 + $0x20] sm:$0xff]
    %v144 = vld [vmem:[#allocation6 + $0x28] sm:$0xff]
    %v145 = vld [vmem:[#allocation6 + $0x30] sm:$0xff]
    %v146 = vld [vmem:[#allocation6 + $0x38] sm:$0xff]
    %v147 = vld [vmem:[#allocation6 + $0x40] sm:$0xff]
    %v148 = vld [vmem:[#allocation6 + $0x48] sm:$0xff]
    %v149 = vld [vmem:[#allocation6 + $0x50] sm:$0xff]
    %v150 = vld [vmem:[#allocation6 + $0x58] sm:$0xff]
    %v151 = vld [vmem:[#allocation6 + $0x60] sm:$0xff]
    %v152 = vld [vmem:[#allocation6 + $0x68] sm:$0xff]
    %v153 = vld [vmem:[#allocation6 + $0x70] sm:$0xff]
    %v154 = vld [vmem:[#allocation6 + $0x78] sm:$0xff]
    %v155 = vld [vmem:[#allocation6 + $0x80] sm:$0xff]
    %v156 = vld [vmem:[#allocation6 + $0x88] sm:$0xff]
    %v157 = vld [vmem:[#allocation6 + $0x90] sm:$0xff]
    %v158 = vld [vmem:[#allocation6 + $0x98] sm:$0xff]
    %v159 = vld [vmem:[#allocation6 + $0xa0] sm:$0xff]
    %v160 = vld [vmem:[#allocation6 + $0xa8] sm:$0xff]
    %v161 = vld [vmem:[#allocation6 + $0xb0] sm:$0xff]
    %v162 = vld [vmem:[#allocation6 + $0xb8] sm:$0xff]
    %v163 = vpack.c.bf16 %v145, %v139
    %v164 = vpack.c.bf16 %v146, %v140
    %v165 = vpack.c.bf16 %v147, %v141
    %v166 = vpack.c.bf16 %v148, %v142
    %v167 = vpack.c.bf16 %v149, %v143
    %v168 = vpack.c.bf16 %v150, %v144
    %v169 = vpack.c.bf16 %v157, %v151
    %v170 = vpack.c.bf16 %v158, %v152
    %v171 = vpack.c.bf16 %v159, %v153
    %v172 = vpack.c.bf16 %v160, %v154
    %v173 = vpack.c.bf16 %v161, %v155
    %v174 = vpack.c.bf16 %v162, %v156
    %v175 = vld [vmem:[#allocation8] sm:$0xf]
    %v176 = vld [vmem:[#allocation8 + $0x4] sm:$0xf]
    %v177 = vld [vmem:[#allocation8 + $0x8] sm:$0xf]
    %v178 = vld [vmem:[#allocation8 + $0xc] sm:$0xf]
    %v179 = vld [vmem:[#allocation8 + $0x10] sm:$0xf]
    %v180 = vld [vmem:[#allocation8 + $0x14] sm:$0xf]
    %v181 = vld [vmem:[#allocation8 + $0x18] sm:$0xf]
    %v182 = vld [vmem:[#allocation8 + $0x1c] sm:$0xf]
    %v183 = vld [vmem:[#allocation8 + $0x20] sm:$0xf]
    %v184 = vld [vmem:[#allocation8 + $0x24] sm:$0xf]
    %v185 = vld [vmem:[#allocation8 + $0x28] sm:$0xf]
    %v186 = vld [vmem:[#allocation8 + $0x2c] sm:$0xf]
    %v187 = vld [vmem:[#allocation8 + $0x30] sm:$0xf]
    %v188 = vld [vmem:[#allocation8 + $0x34] sm:$0xf]
    %v189 = vld [vmem:[#allocation8 + $0x38] sm:$0xf]
    %v190 = vld [vmem:[#allocation8 + $0x3c] sm:$0xf]
    %v191 = vld [vmem:[#allocation8 + $0x40] sm:$0xf]
    %v192 = vld [vmem:[#allocation8 + $0x44] sm:$0xf]
    %v193 = vld [vmem:[#allocation8 + $0x48] sm:$0xf]
    %v194 = vld [vmem:[#allocation8 + $0x4c] sm:$0xf]
    %v195 = vld [vmem:[#allocation8 + $0x50] sm:$0xf]
    %v196 = vld [vmem:[#allocation8 + $0x54] sm:$0xf]
    %v197 = vld [vmem:[#allocation8 + $0x58] sm:$0xf]
    %v198 = vld [vmem:[#allocation8 + $0x5c] sm:$0xf]
    %v199 = vld [vmem:[#allocation8 + $0x60] sm:$0xf]
    %v200 = vld [vmem:[#allocation8 + $0x64] sm:$0xf]
    %v201 = vld [vmem:[#allocation8 + $0x68] sm:$0xf]
    %v202 = vld [vmem:[#allocation8 + $0x6c] sm:$0xf]
    %v203 = vld [vmem:[#allocation8 + $0x70] sm:$0xf]
    %v204 = vld [vmem:[#allocation8 + $0x74] sm:$0xf]
    %v205 = vld [vmem:[#allocation8 + $0x78] sm:$0xf]
    %v206 = vld [vmem:[#allocation8 + $0x7c] sm:$0xf]
    %v207 = vld [vmem:[#allocation8 + $0x80] sm:$0xf]
    %v208 = vld [vmem:[#allocation8 + $0x84] sm:$0xf]
    %v209 = vld [vmem:[#allocation8 + $0x88] sm:$0xf]
    %v210 = vld [vmem:[#allocation8 + $0x8c] sm:$0xf]
    %v211 = vld [vmem:[#allocation8 + $0x90] sm:$0xf]
    %v212 = vld [vmem:[#allocation8 + $0x94] sm:$0xf]
    %v213 = vld [vmem:[#allocation8 + $0x98] sm:$0xf]
    %v214 = vld [vmem:[#allocation8 + $0x9c] sm:$0xf]
    %v215 = vld [vmem:[#allocation8 + $0xa0] sm:$0xf]
    %v216 = vld [vmem:[#allocation8 + $0xa4] sm:$0xf]
    %v217 = vld [vmem:[#allocation8 + $0xa8] sm:$0xf]
    %v218 = vld [vmem:[#allocation8 + $0xac] sm:$0xf]
    %v219 = vld [vmem:[#allocation8 + $0xb0] sm:$0xf]
    %v220 = vld [vmem:[#allocation8 + $0xb4] sm:$0xf]
    %v221 = vld [vmem:[#allocation8 + $0xb8] sm:$0xf]
    %v222 = vld [vmem:[#allocation8 + $0xbc] sm:$0xf]
    %v223 = vld [vmem:[#allocation8 + $0xc0] sm:$0xf]
    %v224 = vld [vmem:[#allocation8 + $0xc4] sm:$0xf]
    %v225 = vld [vmem:[#allocation8 + $0xc8] sm:$0xf]
    %v226 = vld [vmem:[#allocation8 + $0xcc] sm:$0xf]
    %v227 = vld [vmem:[#allocation8 + $0xd0] sm:$0xf]
    %v228 = vld [vmem:[#allocation8 + $0xd4] sm:$0xf]
    %v229 = vld [vmem:[#allocation8 + $0xd8] sm:$0xf]
    %v230 = vld [vmem:[#allocation8 + $0xdc] sm:$0xf]
    %v231 = vld [vmem:[#allocation8 + $0xe0] sm:$0xf]
    %v232 = vld [vmem:[#allocation8 + $0xe4] sm:$0xf]
    %v233 = vld [vmem:[#allocation8 + $0xe8] sm:$0xf]
    %v234 = vld [vmem:[#allocation8 + $0xec] sm:$0xf]
    %v235 = vld [vmem:[#allocation8 + $0xf0] sm:$0xf]
    %v236 = vld [vmem:[#allocation8 + $0xf4] sm:$0xf]
    %v237 = vld [vmem:[#allocation8 + $0xf8] sm:$0xf]
    %v238 = vld [vmem:[#allocation8 + $0xfc] sm:$0xf]
    %v239 = vld [vmem:[#allocation8 + $0x100] sm:$0xf]
    %v240 = vld [vmem:[#allocation8 + $0x104] sm:$0xf]
    %v241 = vld [vmem:[#allocation8 + $0x108] sm:$0xf]
    %v242 = vld [vmem:[#allocation8 + $0x10c] sm:$0xf]
    %v243 = vld [vmem:[#allocation8 + $0x110] sm:$0xf]
    %v244 = vld [vmem:[#allocation8 + $0x114] sm:$0xf]
    %v245 = vld [vmem:[#allocation8 + $0x118] sm:$0xf]
    %v246 = vld [vmem:[#allocation8 + $0x11c] sm:$0xf]
    %v247 = vld [vmem:[#allocation8 + $0x120] sm:$0xf]
    %v248 = vld [vmem:[#allocation8 + $0x124] sm:$0xf]
    %v249 = vld [vmem:[#allocation8 + $0x128] sm:$0xf]
    %v250 = vld [vmem:[#allocation8 + $0x12c] sm:$0xf]
    %v251 = vld [vmem:[#allocation8 + $0x130] sm:$0xf]
    %v252 = vld [vmem:[#allocation8 + $0x134] sm:$0xf]
    %v253 = vld [vmem:[#allocation8 + $0x138] sm:$0xf]
    %v254 = vld [vmem:[#allocation8 + $0x13c] sm:$0xf]
    %v255 = vld [vmem:[#allocation8 + $0x140] sm:$0xf]
    %v256 = vld [vmem:[#allocation8 + $0x144] sm:$0xf]
    %v257 = vld [vmem:[#allocation8 + $0x148] sm:$0xf]
    %v258 = vld [vmem:[#allocation8 + $0x14c] sm:$0xf]
    %v259 = vld [vmem:[#allocation8 + $0x150] sm:$0xf]
    %v260 = vld [vmem:[#allocation8 + $0x154] sm:$0xf]
    %v261 = vld [vmem:[#allocation8 + $0x158] sm:$0xf]
    %v262 = vld [vmem:[#allocation8 + $0x15c] sm:$0xf]
    %v263 = vld [vmem:[#allocation8 + $0x160] sm:$0xf]
    %v264 = vld [vmem:[#allocation8 + $0x164] sm:$0xf]
    %v265 = vld [vmem:[#allocation8 + $0x168] sm:$0xf]
    %v266 = vld [vmem:[#allocation8 + $0x16c] sm:$0xf]
    %v267 = vld [vmem:[#allocation8 + $0x170] sm:$0xf]
    %v268 = vld [vmem:[#allocation8 + $0x174] sm:$0xf]
    %v269 = vld [vmem:[#allocation8 + $0x178] sm:$0xf]
    %v270 = vld [vmem:[#allocation8 + $0x17c] sm:$0xf]
    %v271 = vld [vmem:[%s4] sm:$0x1]
    %v273 = vlaneseq
    %v274 = vshrl.u32 %v273, 7
    %v275 = vsub.s32 0, %v274
    %v276 = vrot.slane %v271, %v275
    %v374 = vunpack.c.l.b16 %v175
    %v375 = vunpack.c.l.b16 %v176
    %v376 = vunpack.c.l.b16 %v177
    %v377 = vunpack.c.l.b16 %v178
    %v378 = vunpack.c.l.b16 %v179
    %v379 = vunpack.c.l.b16 %v180
    %v380 = vunpack.c.l.b16 %v181
    %v381 = vunpack.c.l.b16 %v182
    %v382 = vunpack.c.l.b16 %v183
    %v383 = vunpack.c.l.b16 %v184
    %v384 = vunpack.c.l.b16 %v185
    %v385 = vunpack.c.l.b16 %v186
    %v386 = vunpack.c.l.b16 %v187
    %v387 = vunpack.c.l.b16 %v188
    %v388 = vunpack.c.l.b16 %v189
    %v389 = vunpack.c.l.b16 %v190
    %v390 = vunpack.c.l.b16 %v191
    %v391 = vunpack.c.l.b16 %v192
    %v392 = vunpack.c.l.b16 %v193
    %v393 = vunpack.c.l.b16 %v194
    %v394 = vunpack.c.l.b16 %v195
    %v395 = vunpack.c.l.b16 %v196
    %v396 = vunpack.c.l.b16 %v197
    %v397 = vunpack.c.l.b16 %v198
    %v398 = vunpack.c.l.b16 %v199
    %v399 = vunpack.c.l.b16 %v200
    %v400 = vunpack.c.l.b16 %v201
    %v401 = vunpack.c.l.b16 %v202
    %v402 = vunpack.c.l.b16 %v203
    %v403 = vunpack.c.l.b16 %v204
    %v404 = vunpack.c.l.b16 %v205
    %v405 = vunpack.c.l.b16 %v206
    %v406 = vunpack.c.l.b16 %v207
    %v407 = vunpack.c.l.b16 %v208
    %v408 = vunpack.c.l.b16 %v209
    %v409 = vunpack.c.l.b16 %v210
    %v410 = vunpack.c.l.b16 %v211
    %v411 = vunpack.c.l.b16 %v212
    %v412 = vunpack.c.l.b16 %v213
    %v413 = vunpack.c.l.b16 %v214
    %v414 = vunpack.c.l.b16 %v215
    %v415 = vunpack.c.l.b16 %v216
    %v416 = vunpack.c.l.b16 %v217
    %v417 = vunpack.c.l.b16 %v218
    %v418 = vunpack.c.l.b16 %v219
    %v419 = vunpack.c.l.b16 %v220
    %v420 = vunpack.c.l.b16 %v221
    %v421 = vunpack.c.l.b16 %v222
    %v422 = vunpack.c.l.b16 %v223
    %v423 = vunpack.c.l.b16 %v224
    %v424 = vunpack.c.l.b16 %v225
    %v425 = vunpack.c.l.b16 %v226
    %v426 = vunpack.c.l.b16 %v227
    %v427 = vunpack.c.l.b16 %v228
    %v428 = vunpack.c.l.b16 %v229
    %v429 = vunpack.c.l.b16 %v230
    %v430 = vunpack.c.l.b16 %v231
    %v431 = vunpack.c.l.b16 %v232
    %v432 = vunpack.c.l.b16 %v233
    %v433 = vunpack.c.l.b16 %v234
    %v434 = vunpack.c.l.b16 %v235
    %v435 = vunpack.c.l.b16 %v236
    %v436 = vunpack.c.l.b16 %v237
    %v437 = vunpack.c.l.b16 %v238
    %v438 = vunpack.c.l.b16 %v239
    %v439 = vunpack.c.l.b16 %v240
    %v440 = vunpack.c.l.b16 %v241
    %v441 = vunpack.c.l.b16 %v242
    %v442 = vunpack.c.l.b16 %v243
    %v443 = vunpack.c.l.b16 %v244
    %v444 = vunpack.c.l.b16 %v245
    %v445 = vunpack.c.l.b16 %v246
    %v446 = vunpack.c.l.b16 %v247
    %v447 = vunpack.c.l.b16 %v248
    %v448 = vunpack.c.l.b16 %v249
    %v449 = vunpack.c.l.b16 %v250
    %v450 = vunpack.c.l.b16 %v251
    %v451 = vunpack.c.l.b16 %v252
    %v452 = vunpack.c.l.b16 %v253
    %v453 = vunpack.c.l.b16 %v254
    %v454 = vunpack.c.l.b16 %v255
    %v455 = vunpack.c.l.b16 %v256
    %v456 = vunpack.c.l.b16 %v257
    %v457 = vunpack.c.l.b16 %v258
    %v458 = vunpack.c.l.b16 %v259
    %v459 = vunpack.c.l.b16 %v260
    %v460 = vunpack.c.l.b16 %v261
    %v461 = vunpack.c.l.b16 %v262
    %v462 = vunpack.c.l.b16 %v263
    %v463 = vunpack.c.l.b16 %v264
    %v464 = vunpack.c.l.b16 %v265
    %v465 = vunpack.c.l.b16 %v266
    %v466 = vunpack.c.l.b16 %v267
    %v467 = vunpack.c.l.b16 %v268
    %v468 = vunpack.c.l.b16 %v269
    %v469 = vunpack.c.l.b16 %v270
    %v470 = vpack.c.b16 %v375, %v374
    %v471 = vpack.c.b16 %v377, %v376
    %v472 = vpack.c.b16 %v379, %v378
    %v473 = vpack.c.b16 %v381, %v380
    %v474 = vpack.c.b16 %v383, %v382
    %v475 = vpack.c.b16 %v385, %v384
    %v476 = vpack.c.b16 %v387, %v386
    %v477 = vpack.c.b16 %v389, %v388
    %v478 = vpack.c.b16 %v391, %v390
    %v479 = vpack.c.b16 %v393, %v392
    %v480 = vpack.c.b16 %v395, %v394
    %v481 = vpack.c.b16 %v397, %v396
    %v482 = vpack.c.b16 %v399, %v398
    %v483 = vpack.c.b16 %v401, %v400
    %v484 = vpack.c.b16 %v403, %v402
    %v485 = vpack.c.b16 %v405, %v404
    %v486 = vpack.c.b16 %v407, %v406
    %v487 = vpack.c.b16 %v409, %v408
    %v488 = vpack.c.b16 %v411, %v410
    %v489 = vpack.c.b16 %v413, %v412
    %v490 = vpack.c.b16 %v415, %v414
    %v491 = vpack.c.b16 %v417, %v416
    %v492 = vpack.c.b16 %v419, %v418
    %v493 = vpack.c.b16 %v421, %v420
    %v494 = vpack.c.b16 %v423, %v422
    %v495 = vpack.c.b16 %v425, %v424
    %v496 = vpack.c.b16 %v427, %v426
    %v497 = vpack.c.b16 %v429, %v428
    %v498 = vpack.c.b16 %v431, %v430
    %v499 = vpack.c.b16 %v433, %v432
    %v500 = vpack.c.b16 %v435, %v434
    %v501 = vpack.c.b16 %v437, %v436
    %v502 = vpack.c.b16 %v439, %v438
    %v503 = vpack.c.b16 %v441, %v440
    %v504 = vpack.c.b16 %v443, %v442
    %v505 = vpack.c.b16 %v445, %v444
    %v506 = vpack.c.b16 %v447, %v446
    %v507 = vpack.c.b16 %v449, %v448
    %v508 = vpack.c.b16 %v451, %v450
    %v509 = vpack.c.b16 %v453, %v452
    %v510 = vpack.c.b16 %v455, %v454
    %v511 = vpack.c.b16 %v457, %v456
    %v512 = vpack.c.b16 %v459, %v458
    %v513 = vpack.c.b16 %v461, %v460
    %v514 = vpack.c.b16 %v463, %v462
    %v515 = vpack.c.b16 %v465, %v464
    %v516 = vpack.c.b16 %v467, %v466
    %v517 = vpack.c.b16 %v469, %v468
    %566 = vmatprep.subr.bf16.mxu0 0
    %567 = vmatpush1.bf16.msra.mxu0 %v470
    %568 = vmatprep.subr.bf16.mxu0 0
    %569 = vmatpush1.bf16.msra.mxu0 %v471
    %570 = vmatprep.subr.bf16.mxu0 0
    %571 = vmatpush1.bf16.msra.mxu0 %v472
    %572 = vmatprep.subr.bf16.mxu0 0
    %573 = vmatpush1.bf16.msra.mxu0 %v473
    %574 = vmatprep.subr.bf16.mxu0 0
    %575 = vmatpush1.bf16.msra.mxu0 %v474
    %576 = vmatprep.subr.bf16.mxu0 0
    %577 = vmatpush1.bf16.msra.mxu0 %v475
    %578 = vmatprep.subr.bf16.mxu0 0
    %579 = vmatpush1.bf16.msra.mxu0 %v476
    %580 = vmatprep.subr.bf16.mxu0 0
    %581 = vmatpush1.bf16.msra.mxu0 %v477
    %582 = vmatprep.subr.bf16.mxu0 0
    %583 = vmatpush1.bf16.msra.mxu0 %v478
    %584 = vmatprep.subr.bf16.mxu0 0
    %585 = vmatpush1.bf16.msra.mxu0 %v479
    %586 = vmatprep.subr.bf16.mxu0 0
    %587 = vmatpush1.bf16.msra.mxu0 %v480
    %588 = vmatprep.subr.bf16.mxu0 0
    %589 = vmatpush1.bf16.msra.mxu0 %v481
    %590 = vmatprep.subr.bf16.mxu0 0
    %591 = vmatpush1.bf16.msra.mxu0 %v482
    %592 = vmatprep.subr.bf16.mxu0 0
    %593 = vmatpush1.bf16.msra.mxu0 %v483
    %594 = vmatprep.subr.bf16.mxu0 0
    %595 = vmatpush1.bf16.msra.mxu0 %v484
    %596 = vmatprep.subr.bf16.mxu0 0
    %597 = vmatpush1.bf16.msra.mxu0 %v485
    %598 = vmatprep.mubr.bf16.mxu0 %v128
    %599 = vmatmul.mubr.bf16.gmra.mrb[0].mxu0 %v127
    %v600 = vpop.f32.mrb[0].mxu0
    %v601 = vadd.f32 %v276, %v600
    %v602 = vpop.f32.mrb[0].mxu0
    %v603 = vpop.f32.mrb[0].mxu0
    %v604 = vadd.f32 %v276, %v603
    %v605 = vpop.f32.mrb[0].mxu0
    %606 = vmatprep.mubr.bf16.mxu0 %v134
    %607 = vmatmul.mubr.bf16.gmra.mrb[0].mxu0 %v133
    %v608 = vpop.f32.mrb[0].mxu0
    %v609 = vadd.f32 %v276, %v608
    %v610 = vpop.f32.mrb[0].mxu0
    %v611 = vpop.f32.mrb[0].mxu0
    %v612 = vadd.f32 %v276, %v611
    %v613 = vpop.f32.mrb[0].mxu0
    %614 = vdwg.mxu0
    %615 = vmatprep.subr.bf16.mxu0 0
    %616 = vmatpush1.bf16.msra.mxu0 %v486
    %617 = vmatprep.subr.bf16.mxu0 0
    %618 = vmatpush1.bf16.msra.mxu0 %v487
    %619 = vmatprep.subr.bf16.mxu0 0
    %620 = vmatpush1.bf16.msra.mxu0 %v488
    %621 = vmatprep.subr.bf16.mxu0 0
    %622 = vmatpush1.bf16.msra.mxu0 %v489
    %623 = vmatprep.subr.bf16.mxu0 0
    %624 = vmatpush1.bf16.msra.mxu0 %v490
    %625 = vmatprep.subr.bf16.mxu0 0
    %626 = vmatpush1.bf16.msra.mxu0 %v491
    %627 = vmatprep.subr.bf16.mxu0 0
    %628 = vmatpush1.bf16.msra.mxu0 %v492
    %629 = vmatprep.subr.bf16.mxu0 0
    %630 = vmatpush1.bf16.msra.mxu0 %v493
    %631 = vmatprep.subr.bf16.mxu0 0
    %632 = vmatpush1.bf16.msra.mxu0 %v494
    %633 = vmatprep.subr.bf16.mxu0 0
    %634 = vmatpush1.bf16.msra.mxu0 %v495
    %635 = vmatprep.subr.bf16.mxu0 0
    %636 = vmatpush1.bf16.msra.mxu0 %v496
    %637 = vmatprep.subr.bf16.mxu0 0
    %638 = vmatpush1.bf16.msra.mxu0 %v497
    %639 = vmatprep.subr.bf16.mxu0 0
    %640 = vmatpush1.bf16.msra.mxu0 %v498
    %641 = vmatprep.subr.bf16.mxu0 0
    %642 = vmatpush1.bf16.msra.mxu0 %v499
    %643 = vmatprep.subr.bf16.mxu0 0
    %644 = vmatpush1.bf16.msra.mxu0 %v500
    %645 = vmatprep.subr.bf16.mxu0 0
    %646 = vmatpush1.bf16.msra.mxu0 %v501
    %647 = vmatprep.mubr.bf16.mxu0 %v130
    %648 = vmatmul.mubr.bf16.gmra.mrb[0].mxu0 %v129
    %v649 = vpop.f32.mrb[0].mxu0
    %v650 = vadd.f32 %v601, %v649
    %v651 = vpop.f32.mrb[0].mxu0
    %v652 = vpop.f32.mrb[0].mxu0
    %v653 = vadd.f32 %v604, %v652
    %v654 = vpop.f32.mrb[0].mxu0
    %655 = vmatprep.mubr.bf16.mxu0 %v136
    %656 = vmatmul.mubr.bf16.gmra.mrb[0].mxu0 %v135
    %v657 = vpop.f32.mrb[0].mxu0
    %v658 = vadd.f32 %v609, %v657
    %v659 = vpop.f32.mrb[0].mxu0
    %v660 = vpop.f32.mrb[0].mxu0
    %v661 = vadd.f32 %v612, %v660
    %v662 = vpop.f32.mrb[0].mxu0
    %663 = vdwg.mxu0
    %664 = vmatprep.subr.bf16.mxu0 0
    %665 = vmatpush1.bf16.msra.mxu0 %v502
    %666 = vmatprep.subr.bf16.mxu0 0
    %667 = vmatpush1.bf16.msra.mxu0 %v503
    %668 = vmatprep.subr.bf16.mxu0 0
    %669 = vmatpush1.bf16.msra.mxu0 %v504
    %670 = vmatprep.subr.bf16.mxu0 0
    %671 = vmatpush1.bf16.msra.mxu0 %v505
    %672 = vmatprep.subr.bf16.mxu0 0
    %673 = vmatpush1.bf16.msra.mxu0 %v506
    %674 = vmatprep.subr.bf16.mxu0 0
    %675 = vmatpush1.bf16.msra.mxu0 %v507
    %676 = vmatprep.subr.bf16.mxu0 0
    %677 = vmatpush1.bf16.msra.mxu0 %v508
    %678 = vmatprep.subr.bf16.mxu0 0
    %679 = vmatpush1.bf16.msra.mxu0 %v509
    %680 = vmatprep.subr.bf16.mxu0 0
    %681 = vmatpush1.bf16.msra.mxu0 %v510
    %682 = vmatprep.subr.bf16.mxu0 0
    %683 = vmatpush1.bf16.msra.mxu0 %v511
    %684 = vmatprep.subr.bf16.mxu0 0
    %685 = vmatpush1.bf16.msra.mxu0 %v512
    %686 = vmatprep.subr.bf16.mxu0 0
    %687 = vmatpush1.bf16.msra.mxu0 %v513
    %688 = vmatprep.subr.bf16.mxu0 0
    %689 = vmatpush1.bf16.msra.mxu0 %v514
    %690 = vmatprep.subr.bf16.mxu0 0
    %691 = vmatpush1.bf16.msra.mxu0 %v515
    %692 = vmatprep.subr.bf16.mxu0 0
    %693 = vmatpush1.bf16.msra.mxu0 %v516
    %694 = vmatprep.subr.bf16.mxu0 0
    %695 = vmatpush1.bf16.msra.mxu0 %v517
    %696 = vmatprep.mubr.bf16.mxu0 %v132
    %697 = vmatmul.mubr.bf16.gmra.mrb[0].mxu0 %v131
    %v698 = vpop.f32.mrb[0].mxu0
    %v699 = vadd.f32 %v650, %v698
    %v700 = vpop.f32.mrb[0].mxu0
    %v701 = vpop.f32.mrb[0].mxu0
    %v702 = vadd.f32 %v653, %v701
    %v703 = vpop.f32.mrb[0].mxu0
    %704 = vmatprep.mubr.bf16.mxu0 %v138
    %705 = vmatmul.mubr.bf16.gmra.mrb[0].mxu0 %v137
    %v706 = vpop.f32.mrb[0].mxu0
    %v707 = vadd.f32 %v658, %v706
    %v708 = vpop.f32.mrb[0].mxu0
    %v709 = vpop.f32.mrb[0].mxu0
    %v710 = vadd.f32 %v661, %v709
    %v711 = vpop.f32.mrb[0].mxu0
    %712 = vdwg.mxu0
    %v713 = vld [vmem:[#allocation9] sm:$0xf]
    %v714 = vld [vmem:[#allocation9 + $0x4] sm:$0xf]
    %v715 = vld [vmem:[#allocation9 + $0x8] sm:$0xf]
    %v716 = vld [vmem:[#allocation9 + $0xc] sm:$0xf]
    %v717 = vld [vmem:[#allocation9 + $0x10] sm:$0xf]
    %v718 = vld [vmem:[#allocation9 + $0x14] sm:$0xf]
    %v719 = vld [vmem:[#allocation9 + $0x18] sm:$0xf]
    %v720 = vld [vmem:[#allocation9 + $0x1c] sm:$0xf]
    %v721 = vld [vmem:[#allocation9 + $0x20] sm:$0xf]
    %v722 = vld [vmem:[#allocation9 + $0x24] sm:$0xf]
    %v723 = vld [vmem:[#allocation9 + $0x28] sm:$0xf]
    %v724 = vld [vmem:[#allocation9 + $0x2c] sm:$0xf]
    %v725 = vld [vmem:[#allocation9 + $0x30] sm:$0xf]
    %v726 = vld [vmem:[#allocation9 + $0x34] sm:$0xf]
    %v727 = vld [vmem:[#allocation9 + $0x38] sm:$0xf]
    %v728 = vld [vmem:[#allocation9 + $0x3c] sm:$0xf]
    %v729 = vld [vmem:[#allocation9 + $0x40] sm:$0xf]
    %v730 = vld [vmem:[#allocation9 + $0x44] sm:$0xf]
    %v731 = vld [vmem:[#allocation9 + $0x48] sm:$0xf]
    %v732 = vld [vmem:[#allocation9 + $0x4c] sm:$0xf]
    %v733 = vld [vmem:[#allocation9 + $0x50] sm:$0xf]
    %v734 = vld [vmem:[#allocation9 + $0x54] sm:$0xf]
    %v735 = vld [vmem:[#allocation9 + $0x58] sm:$0xf]
    %v736 = vld [vmem:[#allocation9 + $0x5c] sm:$0xf]
    %v737 = vld [vmem:[#allocation9 + $0x60] sm:$0xf]
    %v738 = vld [vmem:[#allocation9 + $0x64] sm:$0xf]
    %v739 = vld [vmem:[#allocation9 + $0x68] sm:$0xf]
    %v740 = vld [vmem:[#allocation9 + $0x6c] sm:$0xf]
    %v741 = vld [vmem:[#allocation9 + $0x70] sm:$0xf]
    %v742 = vld [vmem:[#allocation9 + $0x74] sm:$0xf]
    %v743 = vld [vmem:[#allocation9 + $0x78] sm:$0xf]
    %v744 = vld [vmem:[#allocation9 + $0x7c] sm:$0xf]
    %v745 = vld [vmem:[#allocation9 + $0x80] sm:$0xf]
    %v746 = vld [vmem:[#allocation9 + $0x84] sm:$0xf]
    %v747 = vld [vmem:[#allocation9 + $0x88] sm:$0xf]
    %v748 = vld [vmem:[#allocation9 + $0x8c] sm:$0xf]
    %v749 = vld [vmem:[#allocation9 + $0x90] sm:$0xf]
    %v750 = vld [vmem:[#allocation9 + $0x94] sm:$0xf]
    %v751 = vld [vmem:[#allocation9 + $0x98] sm:$0xf]
    %v752 = vld [vmem:[#allocation9 + $0x9c] sm:$0xf]
    %v753 = vld [vmem:[#allocation9 + $0xa0] sm:$0xf]
    %v754 = vld [vmem:[#allocation9 + $0xa4] sm:$0xf]
    %v755 = vld [vmem:[#allocation9 + $0xa8] sm:$0xf]
    %v756 = vld [vmem:[#allocation9 + $0xac] sm:$0xf]
    %v757 = vld [vmem:[#allocation9 + $0xb0] sm:$0xf]
    %v758 = vld [vmem:[#allocation9 + $0xb4] sm:$0xf]
    %v759 = vld [vmem:[#allocation9 + $0xb8] sm:$0xf]
    %v760 = vld [vmem:[#allocation9 + $0xbc] sm:$0xf]
    %v761 = vld [vmem:[#allocation9 + $0xc0] sm:$0xf]
    %v762 = vld [vmem:[#allocation9 + $0xc4] sm:$0xf]
    %v763 = vld [vmem:[#allocation9 + $0xc8] sm:$0xf]
    %v764 = vld [vmem:[#allocation9 + $0xcc] sm:$0xf]
    %v765 = vld [vmem:[#allocation9 + $0xd0] sm:$0xf]
    %v766 = vld [vmem:[#allocation9 + $0xd4] sm:$0xf]
    %v767 = vld [vmem:[#allocation9 + $0xd8] sm:$0xf]
    %v768 = vld [vmem:[#allocation9 + $0xdc] sm:$0xf]
    %v769 = vld [vmem:[#allocation9 + $0xe0] sm:$0xf]
    %v770 = vld [vmem:[#allocation9 + $0xe4] sm:$0xf]
    %v771 = vld [vmem:[#allocation9 + $0xe8] sm:$0xf]
    %v772 = vld [vmem:[#allocation9 + $0xec] sm:$0xf]
    %v773 = vld [vmem:[#allocation9 + $0xf0] sm:$0xf]
    %v774 = vld [vmem:[#allocation9 + $0xf4] sm:$0xf]
    %v775 = vld [vmem:[#allocation9 + $0xf8] sm:$0xf]
    %v776 = vld [vmem:[#allocation9 + $0xfc] sm:$0xf]
    %v777 = vld [vmem:[#allocation9 + $0x100] sm:$0xf]
    %v778 = vld [vmem:[#allocation9 + $0x104] sm:$0xf]
    %v779 = vld [vmem:[#allocation9 + $0x108] sm:$0xf]
    %v780 = vld [vmem:[#allocation9 + $0x10c] sm:$0xf]
    %v781 = vld [vmem:[#allocation9 + $0x110] sm:$0xf]
    %v782 = vld [vmem:[#allocation9 + $0x114] sm:$0xf]
    %v783 = vld [vmem:[#allocation9 + $0x118] sm:$0xf]
    %v784 = vld [vmem:[#allocation9 + $0x11c] sm:$0xf]
    %v785 = vld [vmem:[#allocation9 + $0x120] sm:$0xf]
    %v786 = vld [vmem:[#allocation9 + $0x124] sm:$0xf]
    %v787 = vld [vmem:[#allocation9 + $0x128] sm:$0xf]
    %v788 = vld [vmem:[#allocation9 + $0x12c] sm:$0xf]
    %v789 = vld [vmem:[#allocation9 + $0x130] sm:$0xf]
    %v790 = vld [vmem:[#allocation9 + $0x134] sm:$0xf]
    %v791 = vld [vmem:[#allocation9 + $0x138] sm:$0xf]
    %v792 = vld [vmem:[#allocation9 + $0x13c] sm:$0xf]
    %v793 = vld [vmem:[#allocation9 + $0x140] sm:$0xf]
    %v794 = vld [vmem:[#allocation9 + $0x144] sm:$0xf]
    %v795 = vld [vmem:[#allocation9 + $0x148] sm:$0xf]
    %v796 = vld [vmem:[#allocation9 + $0x14c] sm:$0xf]
    %v797 = vld [vmem:[#allocation9 + $0x150] sm:$0xf]
    %v798 = vld [vmem:[#allocation9 + $0x154] sm:$0xf]
    %v799 = vld [vmem:[#allocation9 + $0x158] sm:$0xf]
    %v800 = vld [vmem:[#allocation9 + $0x15c] sm:$0xf]
    %v801 = vld [vmem:[#allocation9 + $0x160] sm:$0xf]
    %v802 = vld [vmem:[#allocation9 + $0x164] sm:$0xf]
    %v803 = vld [vmem:[#allocation9 + $0x168] sm:$0xf]
    %v804 = vld [vmem:[#allocation9 + $0x16c] sm:$0xf]
    %v805 = vld [vmem:[#allocation9 + $0x170] sm:$0xf]
    %v806 = vld [vmem:[#allocation9 + $0x174] sm:$0xf]
    %v807 = vld [vmem:[#allocation9 + $0x178] sm:$0xf]
    %v808 = vld [vmem:[#allocation9 + $0x17c] sm:$0xf]
    %v809 = vld [vmem:[%s6] sm:$0x1]
    %v811 = vlaneseq
    %v812 = vshrl.u32 %v811, 7
    %v813 = vsub.s32 0, %v812
    %v814 = vrot.slane %v809, %v813
    %v912 = vunpack.c.l.b16 %v713
    %v913 = vunpack.c.l.b16 %v714
    %v914 = vunpack.c.l.b16 %v715
    %v915 = vunpack.c.l.b16 %v716
    %v916 = vunpack.c.l.b16 %v717
    %v917 = vunpack.c.l.b16 %v718
    %v918 = vunpack.c.l.b16 %v719
    %v919 = vunpack.c.l.b16 %v720
    %v920 = vunpack.c.l.b16 %v721
    %v921 = vunpack.c.l.b16 %v722
    %v922 = vunpack.c.l.b16 %v723
    %v923 = vunpack.c.l.b16 %v724
    %v924 = vunpack.c.l.b16 %v725
    %v925 = vunpack.c.l.b16 %v726
    %v926 = vunpack.c.l.b16 %v727
    %v927 = vunpack.c.l.b16 %v728
    %v928 = vunpack.c.l.b16 %v729
    %v929 = vunpack.c.l.b16 %v730
    %v930 = vunpack.c.l.b16 %v731
    %v931 = vunpack.c.l.b16 %v732
    %v932 = vunpack.c.l.b16 %v733
    %v933 = vunpack.c.l.b16 %v734
    %v934 = vunpack.c.l.b16 %v735
    %v935 = vunpack.c.l.b16 %v736
    %v936 = vunpack.c.l.b16 %v737
    %v937 = vunpack.c.l.b16 %v738
    %v938 = vunpack.c.l.b16 %v739
    %v939 = vunpack.c.l.b16 %v740
    %v940 = vunpack.c.l.b16 %v741
    %v941 = vunpack.c.l.b16 %v742
    %v942 = vunpack.c.l.b16 %v743
    %v943 = vunpack.c.l.b16 %v744
    %v944 = vunpack.c.l.b16 %v745
    %v945 = vunpack.c.l.b16 %v746
    %v946 = vunpack.c.l.b16 %v747
    %v947 = vunpack.c.l.b16 %v748
    %v948 = vunpack.c.l.b16 %v749
    %v949 = vunpack.c.l.b16 %v750
    %v950 = vunpack.c.l.b16 %v751
    %v951 = vunpack.c.l.b16 %v752
    %v952 = vunpack.c.l.b16 %v753
    %v953 = vunpack.c.l.b16 %v754
    %v954 = vunpack.c.l.b16 %v755
    %v955 = vunpack.c.l.b16 %v756
    %v956 = vunpack.c.l.b16 %v757
    %v957 = vunpack.c.l.b16 %v758
    %v958 = vunpack.c.l.b16 %v759
    %v959 = vunpack.c.l.b16 %v760
    %v960 = vunpack.c.l.b16 %v761
    %v961 = vunpack.c.l.b16 %v762
    %v962 = vunpack.c.l.b16 %v763
    %v963 = vunpack.c.l.b16 %v764
    %v964 = vunpack.c.l.b16 %v765
    %v965 = vunpack.c.l.b16 %v766
    %v966 = vunpack.c.l.b16 %v767
    %v967 = vunpack.c.l.b16 %v768
    %v968 = vunpack.c.l.b16 %v769
    %v969 = vunpack.c.l.b16 %v770
    %v970 = vunpack.c.l.b16 %v771
    %v971 = vunpack.c.l.b16 %v772
    %v972 = vunpack.c.l.b16 %v773
    %v973 = vunpack.c.l.b16 %v774
    %v974 = vunpack.c.l.b16 %v775
    %v975 = vunpack.c.l.b16 %v776
    %v976 = vunpack.c.l.b16 %v777
    %v977 = vunpack.c.l.b16 %v778
    %v978 = vunpack.c.l.b16 %v779
    %v979 = vunpack.c.l.b16 %v780
    %v980 = vunpack.c.l.b16 %v781
    %v981 = vunpack.c.l.b16 %v782
    %v982 = vunpack.c.l.b16 %v783
    %v983 = vunpack.c.l.b16 %v784
    %v984 = vunpack.c.l.b16 %v785
    %v985 = vunpack.c.l.b16 %v786
    %v986 = vunpack.c.l.b16 %v787
    %v987 = vunpack.c.l.b16 %v788
    %v988 = vunpack.c.l.b16 %v789
    %v989 = vunpack.c.l.b16 %v790
    %v990 = vunpack.c.l.b16 %v791
    %v991 = vunpack.c.l.b16 %v792
    %v992 = vunpack.c.l.b16 %v793
    %v993 = vunpack.c.l.b16 %v794
    %v994 = vunpack.c.l.b16 %v795
    %v995 = vunpack.c.l.b16 %v796
    %v996 = vunpack.c.l.b16 %v797
    %v997 = vunpack.c.l.b16 %v798
    %v998 = vunpack.c.l.b16 %v799
    %v999 = vunpack.c.l.b16 %v800
    %v1000 = vunpack.c.l.b16 %v801
    %v1001 = vunpack.c.l.b16 %v802
    %v1002 = vunpack.c.l.b16 %v803
    %v1003 = vunpack.c.l.b16 %v804
    %v1004 = vunpack.c.l.b16 %v805
    %v1005 = vunpack.c.l.b16 %v806
    %v1006 = vunpack.c.l.b16 %v807
    %v1007 = vunpack.c.l.b16 %v808
    %v1008 = vpack.c.b16 %v913, %v912
    %v1009 = vpack.c.b16 %v915, %v914
    %v1010 = vpack.c.b16 %v917, %v916
    %v1011 = vpack.c.b16 %v919, %v918
    %v1012 = vpack.c.b16 %v921, %v920
    %v1013 = vpack.c.b16 %v923, %v922
    %v1014 = vpack.c.b16 %v925, %v924
    %v1015 = vpack.c.b16 %v927, %v926
    %v1016 = vpack.c.b16 %v929, %v928
    %v1017 = vpack.c.b16 %v931, %v930
    %v1018 = vpack.c.b16 %v933, %v932
    %v1019 = vpack.c.b16 %v935, %v934
    %v1020 = vpack.c.b16 %v937, %v936
    %v1021 = vpack.c.b16 %v939, %v938
    %v1022 = vpack.c.b16 %v941, %v940
    %v1023 = vpack.c.b16 %v943, %v942
    %v1024 = vpack.c.b16 %v945, %v944
    %v1025 = vpack.c.b16 %v947, %v946
    %v1026 = vpack.c.b16 %v949, %v948
    %v1027 = vpack.c.b16 %v951, %v950
    %v1028 = vpack.c.b16 %v953, %v952
    %v1029 = vpack.c.b16 %v955, %v954
    %v1030 = vpack.c.b16 %v957, %v956
    %v1031 = vpack.c.b16 %v959, %v958
    %v1032 = vpack.c.b16 %v961, %v960
    %v1033 = vpack.c.b16 %v963, %v962
    %v1034 = vpack.c.b16 %v965, %v964
    %v1035 = vpack.c.b16 %v967, %v966
    %v1036 = vpack.c.b16 %v969, %v968
    %v1037 = vpack.c.b16 %v971, %v970
    %v1038 = vpack.c.b16 %v973, %v972
    %v1039 = vpack.c.b16 %v975, %v974
    %v1040 = vpack.c.b16 %v977, %v976
    %v1041 = vpack.c.b16 %v979, %v978
    %v1042 = vpack.c.b16 %v981, %v980
    %v1043 = vpack.c.b16 %v983, %v982
    %v1044 = vpack.c.b16 %v985, %v984
    %v1045 = vpack.c.b16 %v987, %v986
    %v1046 = vpack.c.b16 %v989, %v988
    %v1047 = vpack.c.b16 %v991, %v990
    %v1048 = vpack.c.b16 %v993, %v992
    %v1049 = vpack.c.b16 %v995, %v994
    %v1050 = vpack.c.b16 %v997, %v996
    %v1051 = vpack.c.b16 %v999, %v998
    %v1052 = vpack.c.b16 %v1001, %v1000
    %v1053 = vpack.c.b16 %v1003, %v1002
    %v1054 = vpack.c.b16 %v1005, %v1004
    %v1055 = vpack.c.b16 %v1007, %v1006
    %1104 = vmatprep.subr.bf16.mxu0 0
    %1105 = vmatpush1.bf16.msra.mxu0 %v1008
    %1106 = vmatprep.subr.bf16.mxu0 0
    %1107 = vmatpush1.bf16.msra.mxu0 %v1009
    %1108 = vmatprep.subr.bf16.mxu0 0
    %1109 = vmatpush1.bf16.msra.mxu0 %v1010
    %1110 = vmatprep.subr.bf16.mxu0 0
    %1111 = vmatpush1.bf16.msra.mxu0 %v1011
    %1112 = vmatprep.subr.bf16.mxu0 0
    %1113 = vmatpush1.bf16.msra.mxu0 %v1012
    %1114 = vmatprep.subr.bf16.mxu0 0
    %1115 = vmatpush1.bf16.msra.mxu0 %v1013
    %1116 = vmatprep.subr.bf16.mxu0 0
    %1117 = vmatpush1.bf16.msra.mxu0 %v1014
    %1118 = vmatprep.subr.bf16.mxu0 0
    %1119 = vmatpush1.bf16.msra.mxu0 %v1015
    %1120 = vmatprep.subr.bf16.mxu0 0
    %1121 = vmatpush1.bf16.msra.mxu0 %v1016
    %1122 = vmatprep.subr.bf16.mxu0 0
    %1123 = vmatpush1.bf16.msra.mxu0 %v1017
    %1124 = vmatprep.subr.bf16.mxu0 0
    %1125 = vmatpush1.bf16.msra.mxu0 %v1018
    %1126 = vmatprep.subr.bf16.mxu0 0
    %1127 = vmatpush1.bf16.msra.mxu0 %v1019
    %1128 = vmatprep.subr.bf16.mxu0 0
    %1129 = vmatpush1.bf16.msra.mxu0 %v1020
    %1130 = vmatprep.subr.bf16.mxu0 0
    %1131 = vmatpush1.bf16.msra.mxu0 %v1021
    %1132 = vmatprep.subr.bf16.mxu0 0
    %1133 = vmatpush1.bf16.msra.mxu0 %v1022
    %1134 = vmatprep.subr.bf16.mxu0 0
    %1135 = vmatpush1.bf16.msra.mxu0 %v1023
    %1136 = vmatprep.mubr.bf16.mxu0 %v164
    %1137 = vmatmul.mubr.bf16.gmra.mrb[0].mxu0 %v163
    %v1138 = vpop.f32.mrb[0].mxu0
    %v1139 = vadd.f32 %v814, %v1138
    %v1140 = vpop.f32.mrb[0].mxu0
    %v1141 = vpop.f32.mrb[0].mxu0
    %v1142 = vadd.f32 %v814, %v1141
    %v1143 = vpop.f32.mrb[0].mxu0
    %1144 = vmatprep.mubr.bf16.mxu0 %v170
    %1145 = vmatmul.mubr.bf16.gmra.mrb[0].mxu0 %v169
    %v1146 = vpop.f32.mrb[0].mxu0
    %v1147 = vadd.f32 %v814, %v1146
    %v1148 = vpop.f32.mrb[0].mxu0
    %v1149 = vpop.f32.mrb[0].mxu0
    %v1150 = vadd.f32 %v814, %v1149
    %v1151 = vpop.f32.mrb[0].mxu0
    %1152 = vdwg.mxu0
    %1153 = vmatprep.subr.bf16.mxu0 0
    %1154 = vmatpush1.bf16.msra.mxu0 %v1024
    %1155 = vmatprep.subr.bf16.mxu0 0
    %1156 = vmatpush1.bf16.msra.mxu0 %v1025
    %1157 = vmatprep.subr.bf16.mxu0 0
    %1158 = vmatpush1.bf16.msra.mxu0 %v1026
    %1159 = vmatprep.subr.bf16.mxu0 0
    %1160 = vmatpush1.bf16.msra.mxu0 %v1027
    %1161 = vmatprep.subr.bf16.mxu0 0
    %1162 = vmatpush1.bf16.msra.mxu0 %v1028
    %1163 = vmatprep.subr.bf16.mxu0 0
    %1164 = vmatpush1.bf16.msra.mxu0 %v1029
    %1165 = vmatprep.subr.bf16.mxu0 0
    %1166 = vmatpush1.bf16.msra.mxu0 %v1030
    %1167 = vmatprep.subr.bf16.mxu0 0
    %1168 = vmatpush1.bf16.msra.mxu0 %v1031
    %1169 = vmatprep.subr.bf16.mxu0 0
    %1170 = vmatpush1.bf16.msra.mxu0 %v1032
    %1171 = vmatprep.subr.bf16.mxu0 0
    %1172 = vmatpush1.bf16.msra.mxu0 %v1033
    %1173 = vmatprep.subr.bf16.mxu0 0
    %1174 = vmatpush1.bf16.msra.mxu0 %v1034
    %1175 = vmatprep.subr.bf16.mxu0 0
    %1176 = vmatpush1.bf16.msra.mxu0 %v1035
    %1177 = vmatprep.subr.bf16.mxu0 0
    %1178 = vmatpush1.bf16.msra.mxu0 %v1036
    %1179 = vmatprep.subr.bf16.mxu0 0
    %1180 = vmatpush1.bf16.msra.mxu0 %v1037
    %1181 = vmatprep.subr.bf16.mxu0 0
    %1182 = vmatpush1.bf16.msra.mxu0 %v1038
    %1183 = vmatprep.subr.bf16.mxu0 0
    %1184 = vmatpush1.bf16.msra.mxu0 %v1039
    %1185 = vmatprep.mubr.bf16.mxu0 %v166
    %1186 = vmatmul.mubr.bf16.gmra.mrb[0].mxu0 %v165
    %v1187 = vpop.f32.mrb[0].mxu0
    %v1188 = vadd.f32 %v1139, %v1187
    %v1189 = vpop.f32.mrb[0].mxu0
    %v1190 = vpop.f32.mrb[0].mxu0
    %v1191 = vadd.f32 %v1142, %v1190
    %v1192 = vpop.f32.mrb[0].mxu0
    %1193 = vmatprep.mubr.bf16.mxu0 %v172
    %1194 = vmatmul.mubr.bf16.gmra.mrb[0].mxu0 %v171
    %v1195 = vpop.f32.mrb[0].mxu0
    %v1196 = vadd.f32 %v1147, %v1195
    %v1197 = vpop.f32.mrb[0].mxu0
    %v1198 = vpop.f32.mrb[0].mxu0
    %v1199 = vadd.f32 %v1150, %v1198
    %v1200 = vpop.f32.mrb[0].mxu0
    %1201 = vdwg.mxu0
    %1202 = vmatprep.subr.bf16.mxu0 0
    %1203 = vmatpush1.bf16.msra.mxu0 %v1040
    %1204 = vmatprep.subr.bf16.mxu0 0
    %1205 = vmatpush1.bf16.msra.mxu0 %v1041
    %1206 = vmatprep.subr.bf16.mxu0 0
    %1207 = vmatpush1.bf16.msra.mxu0 %v1042
    %1208 = vmatprep.subr.bf16.mxu0 0
    %1209 = vmatpush1.bf16.msra.mxu0 %v1043
    %1210 = vmatprep.subr.bf16.mxu0 0
    %1211 = vmatpush1.bf16.msra.mxu0 %v1044
    %1212 = vmatprep.subr.bf16.mxu0 0
    %1213 = vmatpush1.bf16.msra.mxu0 %v1045
    %1214 = vmatprep.subr.bf16.mxu0 0
    %1215 = vmatpush1.bf16.msra.mxu0 %v1046
    %1216 = vmatprep.subr.bf16.mxu0 0
    %1217 = vmatpush1.bf16.msra.mxu0 %v1047
    %1218 = vmatprep.subr.bf16.mxu0 0
    %1219 = vmatpush1.bf16.msra.mxu0 %v1048
    %1220 = vmatprep.subr.bf16.mxu0 0
    %1221 = vmatpush1.bf16.msra.mxu0 %v1049
    %1222 = vmatprep.subr.bf16.mxu0 0
    %1223 = vmatpush1.bf16.msra.mxu0 %v1050
    %1224 = vmatprep.subr.bf16.mxu0 0
    %1225 = vmatpush1.bf16.msra.mxu0 %v1051
    %1226 = vmatprep.subr.bf16.mxu0 0
    %1227 = vmatpush1.bf16.msra.mxu0 %v1052
    %1228 = vmatprep.subr.bf16.mxu0 0
    %1229 = vmatpush1.bf16.msra.mxu0 %v1053
    %1230 = vmatprep.subr.bf16.mxu0 0
    %1231 = vmatpush1.bf16.msra.mxu0 %v1054
    %1232 = vmatprep.subr.bf16.mxu0 0
    %1233 = vmatpush1.bf16.msra.mxu0 %v1055
    %1234 = vmatprep.mubr.bf16.mxu0 %v168
    %1235 = vmatmul.mubr.bf16.gmra.mrb[0].mxu0 %v167
    %v1236 = vpop.f32.mrb[0].mxu0
    %v1237 = vadd.f32 %v1188, %v1236
    %v1238 = vpop.f32.mrb[0].mxu0
    %v1239 = vpop.f32.mrb[0].mxu0
    %v1240 = vadd.f32 %v1191, %v1239
    %v1241 = vpop.f32.mrb[0].mxu0
    %1242 = vmatprep.mubr.bf16.mxu0 %v174
    %1243 = vmatmul.mubr.bf16.gmra.mrb[0].mxu0 %v173
    %v1244 = vpop.f32.mrb[0].mxu0
    %v1245 = vadd.f32 %v1196, %v1244
    %v1246 = vpop.f32.mrb[0].mxu0
    %v1247 = vpop.f32.mrb[0].mxu0
    %v1248 = vadd.f32 %v1199, %v1247
    %v1249 = vpop.f32.mrb[0].mxu0
    %1250 = vdwg.mxu0
    %s1251 = sld [smem:[#allocation2]]
    %v1252 = vmax.f32 %v699, %v702
    %v1253 = vrot.slane %v1252, 4
    %v1254 = vmax.f32 %v1252, %v1253
    %v1255 = vrot.slane %v1254, 2
    %v1256 = vmax.f32 %v1254, %v1255
    %v1257 = vrot.slane %v1256, 1
    %v1258 = vmax.f32 %v1256, %v1257
    %v1259 = vsub.f32 %v699, %v1258
    %v1260 = vsub.f32 %v702, %v1258
    %v1261 = vmul.f32 %v1259, 1.442695
    %v1262 = vpow.pop %v1261
    %v1263 = vmul.f32 %v1260, 1.442695
    %v1264 = vpow.pop %v1263
    %v1265 = vadd.f32 %v1262, %v1264
    %v1266 = vrot.slane %v1265, 4
    %v1267 = vadd.f32 %v1265, %v1266
    %v1268 = vrot.slane %v1267, 2
    %v1269 = vadd.f32 %v1267, %v1268
    %v1270 = vrot.slane %v1269, 1
    %v1271 = vadd.f32 %v1269, %v1270
    %v1272 = vrcp.pop %v1271
    %v1273 = vmul.f32 %v1262, %v1272
    %v1274 = vmul.f32 %v1264, %v1272
    %v1275 = vstv %s1251
    %v1276 = vmul.f32 %v1275, %v1273
    %v1277 = vmul.f32 %v1275, %v1274
    %v1278 = vmul.f32 %v1276, %v699
    %v1279 = vmul.f32 %v1277, %v702
    %v1280 = vmax.f32 %v707, %v710
    %v1281 = vrot.slane %v1280, 4
    %v1282 = vmax.f32 %v1280, %v1281
    %v1283 = vrot.slane %v1282, 2
    %v1284 = vmax.f32 %v1282, %v1283
    %v1285 = vrot.slane %v1284, 1
    %v1286 = vmax.f32 %v1284, %v1285
    %v1287 = vsub.f32 %v707, %v1286
    %v1288 = vsub.f32 %v710, %v1286
    %v1289 = vmul.f32 %v1287, 1.442695
    %v1290 = vpow.pop %v1289
    %v1291 = vmul.f32 %v1288, 1.442695
    %v1292 = vpow.pop %v1291
    %v1293 = vadd.f32 %v1290, %v1292
    %v1294 = vrot.slane %v1293, 4
    %v1295 = vadd.f32 %v1293, %v1294
    %v1296 = vrot.slane %v1295, 2
    %v1297 = vadd.f32 %v1295, %v1296
    %v1298 = vrot.slane %v1297, 1
    %v1299 = vadd.f32 %v1297, %v1298
    %v1300 = vrcp.pop %v1299
    %v1301 = vmul.f32 %v1290, %v1300
    %v1302 = vmul.f32 %v1292, %v1300
    %v1303 = vmul.f32 %v1275, %v1301
    %v1304 = vmul.f32 %v1275, %v1302
    %v1305 = vmul.f32 %v1303, %v707
    %v1306 = vmul.f32 %v1304, %v710
    %v1307 = vadd.f32 %v1278, %v1237
    %v1308 = vadd.f32 %v1279, %v1240
    %v1309 = vadd.f32 %v1305, %v1245
    %v1310 = vadd.f32 %v1306, %v1248
    %v1311 = vpack.c.bf16 %v1308, %v1307
    %v1312 = vpack.c.bf16 %v1310, %v1309
    %v1313 = vld [vmem:[#allocation11] sm:$0xff]
    %v1314 = vld [vmem:[#allocation11 + $0x8] sm:$0xff]
    %v1315 = vld [vmem:[#allocation11 + $0x10] sm:$0xff]
    %v1316 = vld [vmem:[#allocation11 + $0x18] sm:$0xff]
    %v1317 = vld [vmem:[#allocation11 + $0x20] sm:$0xff]
    %v1318 = vld [vmem:[#allocation11 + $0x28] sm:$0xff]
    %v1319 = vld [vmem:[#allocation11 + $0x30] sm:$0xff]
    %v1320 = vld [vmem:[#allocation11 + $0x38] sm:$0xff]
    %v1321 = vld [vmem:[#allocation11 + $0x40] sm:$0xff]
    %v1322 = vld [vmem:[#allocation11 + $0x48] sm:$0xff]
    %v1323 = vld [vmem:[#allocation11 + $0x50] sm:$0xff]
    %v1324 = vld [vmem:[#allocation11 + $0x58] sm:$0xff]
    %v1325 = vld [vmem:[#allocation11 + $0x60] sm:$0xff]
    %v1326 = vld [vmem:[#allocation11 + $0x68] sm:$0xff]
    %v1327 = vld [vmem:[#allocation11 + $0x70] sm:$0xff]
    %v1328 = vld [vmem:[#allocation11 + $0x78] sm:$0xff]
    %v1329 = vld [vmem:[#allocation11 + $0x80] sm:$0xff]
    %v1330 = vld [vmem:[#allocation11 + $0x88] sm:$0xff]
    %v1331 = vld [vmem:[#allocation11 + $0x90] sm:$0xff]
    %v1332 = vld [vmem:[#allocation11 + $0x98] sm:$0xff]
    %v1333 = vld [vmem:[#allocation11 + $0xa0] sm:$0xff]
    %v1334 = vld [vmem:[#allocation11 + $0xa8] sm:$0xff]
    %v1335 = vld [vmem:[#allocation11 + $0xb0] sm:$0xff]
    %v1336 = vld [vmem:[#allocation11 + $0xb8] sm:$0xff]
    %v1337 = vld [vmem:[#allocation11 + $0xc0] sm:$0xff]
    %v1338 = vld [vmem:[#allocation11 + $0xc8] sm:$0xff]
    %v1339 = vld [vmem:[#allocation11 + $0xd0] sm:$0xff]
    %v1340 = vld [vmem:[#allocation11 + $0xd8] sm:$0xff]
    %v1341 = vld [vmem:[#allocation11 + $0xe0] sm:$0xff]
    %v1342 = vld [vmem:[#allocation11 + $0xe8] sm:$0xff]
    %v1343 = vld [vmem:[#allocation11 + $0xf0] sm:$0xff]
    %v1344 = vld [vmem:[#allocation11 + $0xf8] sm:$0xff]
    %v1345 = vld [vmem:[#allocation11 + $0x100] sm:$0xff]
    %v1346 = vld [vmem:[#allocation11 + $0x108] sm:$0xff]
    %v1347 = vld [vmem:[#allocation11 + $0x110] sm:$0xff]
    %v1348 = vld [vmem:[#allocation11 + $0x118] sm:$0xff]
    %v1349 = vld [vmem:[#allocation11 + $0x120] sm:$0xff]
    %v1350 = vld [vmem:[#allocation11 + $0x128] sm:$0xff]
    %v1351 = vld [vmem:[#allocation11 + $0x130] sm:$0xff]
    %v1352 = vld [vmem:[#allocation11 + $0x138] sm:$0xff]
    %v1353 = vld [vmem:[#allocation11 + $0x140] sm:$0xff]
    %v1354 = vld [vmem:[#allocation11 + $0x148] sm:$0xff]
    %v1355 = vld [vmem:[#allocation11 + $0x150] sm:$0xff]
    %v1356 = vld [vmem:[#allocation11 + $0x158] sm:$0xff]
    %v1357 = vld [vmem:[#allocation11 + $0x160] sm:$0xff]
    %v1358 = vld [vmem:[#allocation11 + $0x168] sm:$0xff]
    %v1359 = vld [vmem:[#allocation11 + $0x170] sm:$0xff]
    %v1360 = vld [vmem:[#allocation11 + $0x178] sm:$0xff]
    %v1361 = vld [vmem:[%s8] sm:$0x3f]
    %v1363 = vlaneseq
    %v1364 = vshrl.u32 %v1363, 7
    %v1365 = vsub.s32 0, %v1364
    %v1366 = vrot.slane %v1361, %v1365
    %v1367 = vlaneseq
    %v1368 = vshrl.u32 %v1367, 7
    %v1369 = vsub.s32 1, %v1368
    %v1370 = vrot.slane %v1361, %v1369
    %v1371 = vlaneseq
    %v1372 = vshrl.u32 %v1371, 7
    %v1373 = vsub.s32 2, %v1372
    %v1374 = vrot.slane %v1361, %v1373
    %v1375 = vlaneseq
    %v1376 = vshrl.u32 %v1375, 7
    %v1377 = vsub.s32 3, %v1376
    %v1378 = vrot.slane %v1361, %v1377
    %v1379 = vlaneseq
    %v1380 = vshrl.u32 %v1379, 7
    %v1381 = vsub.s32 4, %v1380
    %v1382 = vrot.slane %v1361, %v1381
    %v1383 = vlaneseq
    %v1384 = vshrl.u32 %v1383, 7
    %v1385 = vsub.s32 5, %v1384
    %v1386 = vrot.slane %v1361, %v1385
    %v1441 = vunpack.c.l.b16 %v1313
    %v1442 = vunpack.c.h.b16 %v1313
    %v1443 = vunpack.c.l.b16 %v1314
    %v1444 = vunpack.c.h.b16 %v1314
    %v1445 = vunpack.c.l.b16 %v1315
    %v1446 = vunpack.c.h.b16 %v1315
    %v1447 = vunpack.c.l.b16 %v1316
    %v1448 = vunpack.c.h.b16 %v1316
    %v1449 = vunpack.c.l.b16 %v1317
    %v1450 = vunpack.c.h.b16 %v1317
    %v1451 = vunpack.c.l.b16 %v1318
    %v1452 = vunpack.c.h.b16 %v1318
    %v1453 = vunpack.c.l.b16 %v1319
    %v1454 = vunpack.c.h.b16 %v1319
    %v1455 = vunpack.c.l.b16 %v1320
    %v1456 = vunpack.c.h.b16 %v1320
    %v1457 = vunpack.c.l.b16 %v1321
    %v1458 = vunpack.c.h.b16 %v1321
    %v1459 = vunpack.c.l.b16 %v1322
    %v1460 = vunpack.c.h.b16 %v1322
    %v1461 = vunpack.c.l.b16 %v1323
    %v1462 = vunpack.c.h.b16 %v1323
    %v1463 = vunpack.c.l.b16 %v1324
    %v1464 = vunpack.c.h.b16 %v1324
    %v1465 = vunpack.c.l.b16 %v1325
    %v1466 = vunpack.c.h.b16 %v1325
    %v1467 = vunpack.c.l.b16 %v1326
    %v1468 = vunpack.c.h.b16 %v1326
    %v1469 = vunpack.c.l.b16 %v1327
    %v1470 = vunpack.c.h.b16 %v1327
    %v1471 = vunpack.c.l.b16 %v1328
    %v1472 = vunpack.c.h.b16 %v1328
    %v1473 = vunpack.c.l.b16 %v1329
    %v1474 = vunpack.c.h.b16 %v1329
    %v1475 = vunpack.c.l.b16 %v1330
    %v1476 = vunpack.c.h.b16 %v1330
    %v1477 = vunpack.c.l.b16 %v1331
    %v1478 = vunpack.c.h.b16 %v1331
    %v1479 = vunpack.c.l.b16 %v1332
    %v1480 = vunpack.c.h.b16 %v1332
    %v1481 = vunpack.c.l.b16 %v1333
    %v1482 = vunpack.c.h.b16 %v1333
    %v1483 = vunpack.c.l.b16 %v1334
    %v1484 = vunpack.c.h.b16 %v1334
    %v1485 = vunpack.c.l.b16 %v1335
    %v1486 = vunpack.c.h.b16 %v1335
    %v1487 = vunpack.c.l.b16 %v1336
    %v1488 = vunpack.c.h.b16 %v1336
    %v1489 = vunpack.c.l.b16 %v1337
    %v1490 = vunpack.c.h.b16 %v1337
    %v1491 = vunpack.c.l.b16 %v1338
    %v1492 = vunpack.c.h.b16 %v1338
    %v1493 = vunpack.c.l.b16 %v1339
    %v1494 = vunpack.c.h.b16 %v1339
    %v1495 = vunpack.c.l.b16 %v1340
    %v1496 = vunpack.c.h.b16 %v1340
    %v1497 = vunpack.c.l.b16 %v1341
    %v1498 = vunpack.c.h.b16 %v1341
    %v1499 = vunpack.c.l.b16 %v1342
    %v1500 = vunpack.c.h.b16 %v1342
    %v1501 = vunpack.c.l.b16 %v1343
    %v1502 = vunpack.c.h.b16 %v1343
    %v1503 = vunpack.c.l.b16 %v1344
    %v1504 = vunpack.c.h.b16 %v1344
    %v1505 = vunpack.c.l.b16 %v1345
    %v1506 = vunpack.c.h.b16 %v1345
    %v1507 = vunpack.c.l.b16 %v1346
    %v1508 = vunpack.c.h.b16 %v1346
    %v1509 = vunpack.c.l.b16 %v1347
    %v1510 = vunpack.c.h.b16 %v1347
    %v1511 = vunpack.c.l.b16 %v1348
    %v1512 = vunpack.c.h.b16 %v1348
    %v1513 = vunpack.c.l.b16 %v1349
    %v1514 = vunpack.c.h.b16 %v1349
    %v1515 = vunpack.c.l.b16 %v1350
    %v1516 = vunpack.c.h.b16 %v1350
    %v1517 = vunpack.c.l.b16 %v1351
    %v1518 = vunpack.c.h.b16 %v1351
    %v1519 = vunpack.c.l.b16 %v1352
    %v1520 = vunpack.c.h.b16 %v1352
    %v1521 = vunpack.c.l.b16 %v1353
    %v1522 = vunpack.c.h.b16 %v1353
    %v1523 = vunpack.c.l.b16 %v1354
    %v1524 = vunpack.c.h.b16 %v1354
    %v1525 = vunpack.c.l.b16 %v1355
    %v1526 = vunpack.c.h.b16 %v1355
    %v1527 = vunpack.c.l.b16 %v1356
    %v1528 = vunpack.c.h.b16 %v1356
    %v1529 = vunpack.c.l.b16 %v1357
    %v1530 = vunpack.c.h.b16 %v1357
    %v1531 = vunpack.c.l.b16 %v1358
    %v1532 = vunpack.c.h.b16 %v1358
    %v1533 = vunpack.c.l.b16 %v1359
    %v1534 = vunpack.c.h.b16 %v1359
    %v1535 = vunpack.c.l.b16 %v1360
    %v1536 = vunpack.c.h.b16 %v1360
    %v1537 = vpack.c.b16 %v1447, %v1441
    %v1538 = vpack.c.b16 %v1448, %v1442
    %v1539 = vpack.c.b16 %v1449, %v1443
    %v1540 = vpack.c.b16 %v1450, %v1444
    %v1541 = vpack.c.b16 %v1451, %v1445
    %v1542 = vpack.c.b16 %v1452, %v1446
    %v1543 = vpack.c.b16 %v1459, %v1453
    %v1544 = vpack.c.b16 %v1460, %v1454
    %v1545 = vpack.c.b16 %v1461, %v1455
    %v1546 = vpack.c.b16 %v1462, %v1456
    %v1547 = vpack.c.b16 %v1463, %v1457
    %v1548 = vpack.c.b16 %v1464, %v1458
    %v1549 = vpack.c.b16 %v1471, %v1465
    %v1550 = vpack.c.b16 %v1472, %v1466
    %v1551 = vpack.c.b16 %v1473, %v1467
    %v1552 = vpack.c.b16 %v1474, %v1468
    %v1553 = vpack.c.b16 %v1475, %v1469
    %v1554 = vpack.c.b16 %v1476, %v1470
    %v1555 = vpack.c.b16 %v1483, %v1477
    %v1556 = vpack.c.b16 %v1484, %v1478
    %v1557 = vpack.c.b16 %v1485, %v1479
    %v1558 = vpack.c.b16 %v1486, %v1480
    %v1559 = vpack.c.b16 %v1487, %v1481
    %v1560 = vpack.c.b16 %v1488, %v1482
    %v1561 = vpack.c.b16 %v1495, %v1489
    %v1562 = vpack.c.b16 %v1496, %v1490
    %v1563 = vpack.c.b16 %v1497, %v1491
    %v1564 = vpack.c.b16 %v1498, %v1492
    %v1565 = vpack.c.b16 %v1499, %v1493
    %v1566 = vpack.c.b16 %v1500, %v1494
    %v1567 = vpack.c.b16 %v1507, %v1501
    %v1568 = vpack.c.b16 %v1508, %v1502
    %v1569 = vpack.c.b16 %v1509, %v1503
    %v1570 = vpack.c.b16 %v1510, %v1504
    %v1571 = vpack.c.b16 %v1511, %v1505
    %v1572 = vpack.c.b16 %v1512, %v1506
    %v1573 = vpack.c.b16 %v1519, %v1513
    %v1574 = vpack.c.b16 %v1520, %v1514
    %v1575 = vpack.c.b16 %v1521, %v1515
    %v1576 = vpack.c.b16 %v1522, %v1516
    %v1577 = vpack.c.b16 %v1523, %v1517
    %v1578 = vpack.c.b16 %v1524, %v1518
    %v1579 = vpack.c.b16 %v1531, %v1525
    %v1580 = vpack.c.b16 %v1532, %v1526
    %v1581 = vpack.c.b16 %v1533, %v1527
    %v1582 = vpack.c.b16 %v1534, %v1528
    %v1583 = vpack.c.b16 %v1535, %v1529
    %v1584 = vpack.c.b16 %v1536, %v1530
    %1633 = vmatprep.subr.bf16.mxu0 %v1538
    %1634 = vmatpush1.bf16.msra.mxu0 %v1537
    %1635 = vmatprep.subr.bf16.mxu0 %v1544
    %1636 = vmatpush1.bf16.msra.mxu0 %v1543
    %1637 = vmatprep.subr.bf16.mxu0 %v1550
    %1638 = vmatpush1.bf16.msra.mxu0 %v1549
    %1639 = vmatprep.subr.bf16.mxu0 %v1556
    %1640 = vmatpush1.bf16.msra.mxu0 %v1555
    %1641 = vmatprep.subr.bf16.mxu0 %v1562
    %1642 = vmatpush1.bf16.msra.mxu0 %v1561
    %1643 = vmatprep.subr.bf16.mxu0 %v1568
    %1644 = vmatpush1.bf16.msra.mxu0 %v1567
    %1645 = vmatprep.subr.bf16.mxu0 %v1574
    %1646 = vmatpush1.bf16.msra.mxu0 %v1573
    %1647 = vmatprep.subr.bf16.mxu0 %v1580
    %1648 = vmatpush1.bf16.msra.mxu0 %v1579
    %1649 = vmatprep.subr.bf16.mxu0 0
    %1650 = vmatpush1.bf16.msra.mxu0 0
    %1651 = vmatprep.subr.bf16.mxu0 0
    %1652 = vmatpush1.bf16.msra.mxu0 0
    %1653 = vmatprep.subr.bf16.mxu0 0
    %1654 = vmatpush1.bf16.msra.mxu0 0
    %1655 = vmatprep.subr.bf16.mxu0 0
    %1656 = vmatpush1.bf16.msra.mxu0 0
    %1657 = vmatprep.subr.bf16.mxu0 0
    %1658 = vmatpush1.bf16.msra.mxu0 0
    %1659 = vmatprep.subr.bf16.mxu0 0
    %1660 = vmatpush1.bf16.msra.mxu0 0
    %1661 = vmatprep.subr.bf16.mxu0 0
    %1662 = vmatpush1.bf16.msra.mxu0 0
    %1663 = vmatprep.subr.bf16.mxu0 0
    %1664 = vmatpush1.bf16.msra.mxu0 0
    %1665 = vmatprep.mubr.bf16.mxu0 0
    %1666 = vmatmul.mubr.bf16.gmra.mrb[0].mxu0 %v1311
    %v1667 = vpop.f32.mrb[0].mxu0
    %v1668 = vadd.f32 %v1366, %v1667
    %v1669 = vpop.f32.mrb[0].mxu0
    %v1670 = vadd.f32 %v1370, %v1669
    %v1671 = vpop.f32.mrb[0].mxu0
    %v1672 = vadd.f32 %v1366, %v1671
    %v1673 = vpop.f32.mrb[0].mxu0
    %v1674 = vadd.f32 %v1370, %v1673
    %1675 = vmatprep.mubr.bf16.mxu0 0
    %1676 = vmatmul.mubr.bf16.gmra.mrb[0].mxu0 %v1312
    %v1677 = vpop.f32.mrb[0].mxu0
    %v1678 = vadd.f32 %v1366, %v1677
    %v1679 = vpop.f32.mrb[0].mxu0
    %v1680 = vadd.f32 %v1370, %v1679
    %v1681 = vpop.f32.mrb[0].mxu0
    %v1682 = vadd.f32 %v1366, %v1681
    %v1683 = vpop.f32.mrb[0].mxu0
    %v1684 = vadd.f32 %v1370, %v1683
    %1685 = vdwg.mxu0
    %1686 = vmatprep.subr.bf16.mxu0 %v1540
    %1687 = vmatpush1.bf16.msra.mxu0 %v1539
    %1688 = vmatprep.subr.bf16.mxu0 %v1546
    %1689 = vmatpush1.bf16.msra.mxu0 %v1545
    %1690 = vmatprep.subr.bf16.mxu0 %v1552
    %1691 = vmatpush1.bf16.msra.mxu0 %v1551
    %1692 = vmatprep.subr.bf16.mxu0 %v1558
    %1693 = vmatpush1.bf16.msra.mxu0 %v1557
    %1694 = vmatprep.subr.bf16.mxu0 %v1564
    %1695 = vmatpush1.bf16.msra.mxu0 %v1563
    %1696 = vmatprep.subr.bf16.mxu0 %v1570
    %1697 = vmatpush1.bf16.msra.mxu0 %v1569
    %1698 = vmatprep.subr.bf16.mxu0 %v1576
    %1699 = vmatpush1.bf16.msra.mxu0 %v1575
    %1700 = vmatprep.subr.bf16.mxu0 %v1582
    %1701 = vmatpush1.bf16.msra.mxu0 %v1581
    %1702 = vmatprep.subr.bf16.mxu0 0
    %1703 = vmatpush1.bf16.msra.mxu0 0
    %1704 = vmatprep.subr.bf16.mxu0 0
    %1705 = vmatpush1.bf16.msra.mxu0 0
    %1706 = vmatprep.subr.bf16.mxu0 0
    %1707 = vmatpush1.bf16.msra.mxu0 0
    %1708 = vmatprep.subr.bf16.mxu0 0
    %1709 = vmatpush1.bf16.msra.mxu0 0
    %1710 = vmatprep.subr.bf16.mxu0 0
    %1711 = vmatpush1.bf16.msra.mxu0 0
    %1712 = vmatprep.subr.bf16.mxu0 0
    %1713 = vmatpush1.bf16.msra.mxu0 0
    %1714 = vmatprep.subr.bf16.mxu0 0
    %1715 = vmatpush1.bf16.msra.mxu0 0
    %1716 = vmatprep.subr.bf16.mxu0 0
    %1717 = vmatpush1.bf16.msra.mxu0 0
    %1718 = vmatprep.mubr.bf16.mxu0 0
    %1719 = vmatmul.mubr.bf16.gmra.mrb[0].mxu0 %v1311
    %v1720 = vpop.f32.mrb[0].mxu0
    %v1721 = vadd.f32 %v1374, %v1720
    %v1722 = vpop.f32.mrb[0].mxu0
    %v1723 = vadd.f32 %v1378, %v1722
    %v1724 = vpop.f32.mrb[0].mxu0
    %v1725 = vadd.f32 %v1374, %v1724
    %v1726 = vpop.f32.mrb[0].mxu0
    %v1727 = vadd.f32 %v1378, %v1726
    %1728 = vmatprep.mubr.bf16.mxu0 0
    %1729 = vmatmul.mubr.bf16.gmra.mrb[0].mxu0 %v1312
    %v1730 = vpop.f32.mrb[0].mxu0
    %v1731 = vadd.f32 %v1374, %v1730
    %v1732 = vpop.f32.mrb[0].mxu0
    %v1733 = vadd.f32 %v1378, %v1732
    %v1734 = vpop.f32.mrb[0].mxu0
    %v1735 = vadd.f32 %v1374, %v1734
    %v1736 = vpop.f32.mrb[0].mxu0
    %v1737 = vadd.f32 %v1378, %v1736
    %1738 = vdwg.mxu0
    %1739 = vmatprep.subr.bf16.mxu0 %v1542
    %1740 = vmatpush1.bf16.msra.mxu0 %v1541
    %1741 = vmatprep.subr.bf16.mxu0 %v1548
    %1742 = vmatpush1.bf16.msra.mxu0 %v1547
    %1743 = vmatprep.subr.bf16.mxu0 %v1554
    %1744 = vmatpush1.bf16.msra.mxu0 %v1553
    %1745 = vmatprep.subr.bf16.mxu0 %v1560
    %1746 = vmatpush1.bf16.msra.mxu0 %v1559
    %1747 = vmatprep.subr.bf16.mxu0 %v1566
    %1748 = vmatpush1.bf16.msra.mxu0 %v1565
    %1749 = vmatprep.subr.bf16.mxu0 %v1572
    %1750 = vmatpush1.bf16.msra.mxu0 %v1571
    %1751 = vmatprep.subr.bf16.mxu0 %v1578
    %1752 = vmatpush1.bf16.msra.mxu0 %v1577
    %1753 = vmatprep.subr.bf16.mxu0 %v1584
    %1754 = vmatpush1.bf16.msra.mxu0 %v1583
    %1755 = vmatprep.subr.bf16.mxu0 0
    %1756 = vmatpush1.bf16.msra.mxu0 0
    %1757 = vmatprep.subr.bf16.mxu0 0
    %1758 = vmatpush1.bf16.msra.mxu0 0
    %1759 = vmatprep.subr.bf16.mxu0 0
    %1760 = vmatpush1.bf16.msra.mxu0 0
    %1761 = vmatprep.subr.bf16.mxu0 0
    %1762 = vmatpush1.bf16.msra.mxu0 0
    %1763 = vmatprep.subr.bf16.mxu0 0
    %1764 = vmatpush1.bf16.msra.mxu0 0
    %1765 = vmatprep.subr.bf16.mxu0 0
    %1766 = vmatpush1.bf16.msra.mxu0 0
    %1767 = vmatprep.subr.bf16.mxu0 0
    %1768 = vmatpush1.bf16.msra.mxu0 0
    %1769 = vmatprep.subr.bf16.mxu0 0
    %1770 = vmatpush1.bf16.msra.mxu0 0
    %1771 = vmatprep.mubr.bf16.mxu0 0
    %1772 = vmatmul.mubr.bf16.gmra.mrb[0].mxu0 %v1311
    %v1773 = vpop.f32.mrb[0].mxu0
    %v1774 = vadd.f32 %v1382, %v1773
    %v1775 = vpop.f32.mrb[0].mxu0
    %v1776 = vadd.f32 %v1386, %v1775
    %v1777 = vpop.f32.mrb[0].mxu0
    %v1778 = vadd.f32 %v1382, %v1777
    %v1779 = vpop.f32.mrb[0].mxu0
    %v1780 = vadd.f32 %v1386, %v1779
    %1781 = vmatprep.mubr.bf16.mxu0 0
    %1782 = vmatmul.mubr.bf16.gmra.mrb[0].mxu0 %v1312
    %v1783 = vpop.f32.mrb[0].mxu0
    %v1784 = vadd.f32 %v1382, %v1783
    %v1785 = vpop.f32.mrb[0].mxu0
    %v1786 = vadd.f32 %v1386, %v1785
    %v1787 = vpop.f32.mrb[0].mxu0
    %v1788 = vadd.f32 %v1382, %v1787
    %v1789 = vpop.f32.mrb[0].mxu0
    %v1790 = vadd.f32 %v1386, %v1789
    %1791 = vdwg.mxu0
    %1792 = vst [vmem:[#allocation12] sm:$0xff] %v1668
    %1793 = vst [vmem:[#allocation12 + $0x8] sm:$0xff] %v1670
    %1794 = vst [vmem:[#allocation12 + $0x10] sm:$0xff] %v1721
    %1795 = vst [vmem:[#allocation12 + $0x18] sm:$0xff] %v1723
    %1796 = vst [vmem:[#allocation12 + $0x20] sm:$0xff] %v1774
    %1797 = vst [vmem:[#allocation12 + $0x28] sm:$0xff] %v1776
    %1798 = vst [vmem:[#allocation12 + $0x30] sm:$0xff] %v1672
    %1799 = vst [vmem:[#allocation12 + $0x38] sm:$0xff] %v1674
    %1800 = vst [vmem:[#allocation12 + $0x40] sm:$0xff] %v1725
    %1801 = vst [vmem:[#allocation12 + $0x48] sm:$0xff] %v1727
    %1802 = vst [vmem:[#allocation12 + $0x50] sm:$0xff] %v1778
    %1803 = vst [vmem:[#allocation12 + $0x58] sm:$0xff] %v1780
    %1804 = vst [vmem:[#allocation12 + $0x60] sm:$0xff] %v1678
    %1805 = vst [vmem:[#allocation12 + $0x68] sm:$0xff] %v1680
    %1806 = vst [vmem:[#allocation12 + $0x70] sm:$0xff] %v1731
    %1807 = vst [vmem:[#allocation12 + $0x78] sm:$0xff] %v1733
    %1808 = vst [vmem:[#allocation12 + $0x80] sm:$0xff] %v1784
    %1809 = vst [vmem:[#allocation12 + $0x88] sm:$0xff] %v1786
    %1810 = vst [vmem:[#allocation12 + $0x90] sm:$0xff] %v1682
    %1811 = vst [vmem:[#allocation12 + $0x98] sm:$0xff] %v1684
    %1812 = vst [vmem:[#allocation12 + $0xa0] sm:$0xff] %v1735
    %1813 = vst [vmem:[#allocation12 + $0xa8] sm:$0xff] %v1737
    %1814 = vst [vmem:[#allocation12 + $0xb0] sm:$0xff] %v1788
    %1815 = vst [vmem:[#allocation12 + $0xb8] sm:$0xff] %v1790
    // Predicated region
    $region58: #{tpu_custom_call.1} parent=1 // pred_check
      _
    $region59: #{tpu_custom_call.1} parent=1 // pred_check_branch
      %1817 = sbr.rel (0) target = $region61
    $region60: #{tpu_custom_call.1} parent=1 // pred_region
      %s1819 = ssub.s32 3072, 3072
      %1820 = vsyncadd [#allocation5], %s1819
      %s1821 = sshll.u32 [#allocation12], 4
      %s1822 = int_to_ptr.vmem [resolvable:$true] %s1821
      %1827 = dma.vmem_to_hbm [thread:$0]  %s1822, 3072, %s9, [#allocation5], 768, 768, 48
    $region61: #{tpu_custom_call.1} parent=1 // pred_fallthru
      _
    // Predicated region
    $region62: #{tpu_custom_call.1} parent=1 // pred_check
      _
    $region63: #{tpu_custom_call.1} parent=1 // pred_check_branch
      %1829 = sbr.rel (0) target = $region65
    $region64: #{tpu_custom_call.1} parent=1 // pred_region
      %1830 = dma.done [#allocation5], 3072
    $region65: #{tpu_custom_call.1} parent=1 // pred_fallthru
      _
    %1831 = vsyncpa [#allocation4], 1
    %1832 = vsyncpa [#allocation7], 1
    %1833 = vsyncpa [#allocation10], 1
    %1834 = vsyncpa [#allocation5], 1

</llo_original>
